<compile_context>
chip_gen: v7x
topology: tpu7x:2x2x1
jax: 0.10.0
libtpu: 0.0.40
codegen_flags: <defaults>
</compile_context>

<pallas_src>
import math
import numpy as np
import jax
import jax.numpy as jnp
from jax import lax
from jax.experimental import pallas as pl
from jax.experimental.pallas import tpu as pltpu

# ---- problem sizes ----
N2, CIN, H2, W2 = 16, 3, 6, 6        # x2: (16, 3, 6, 6)  (matches the PyTorch spec)
N3, H3, W3 = 1, 5, 5                 # x3: (1, 3, 5, 5)   (adjusted, see NOTE above)
COUT = 3
K1, K2, K3 = 3, 2, 1
HO, WO = H2 - K1 + 1, W2 - K1 + 1    # 4, 4  (== H3 - K2 + 1)
NPIX = N2 * HO * WO                  # 256 lane-dense columns
BN_EPS = 1e-5
_PREC = lax.Precision.HIGHEST


def model_kernel(w1_ref, b1_ref, w2_ref, b2_ref, w3_ref, b3_ref,
                 gamma_ref, beta_ref, p1_ref, p2_ref,
                 s_ref, u_ref, y_ref):
    # conv1 as one MXU matmul over im2col patches: (3,27) @ (27,256)
    s = jnp.dot(w1_ref[...], p1_ref[...],
                preferred_element_type=jnp.float32, precision=_PREC) + b1_ref[...]
    # conv2 (t), patches already tiled over the batch along lanes: (3,12) @ (12,256)
    t = jnp.dot(w2_ref[...], p2_ref[...],
                preferred_element_type=jnp.float32, precision=_PREC) + b2_ref[...]
    # conv3 is a 1x1 conv -> pure channel matmul on (s + t): (3,3) @ (3,256)
    u = jnp.dot(w3_ref[...], s + t,
                preferred_element_type=jnp.float32, precision=_PREC) + b3_ref[...]

    # BatchNorm2d, training mode (biased batch statistics), all channels at once.
    inv_cnt = 1.0 / NPIX
    mean = jnp.sum(u, axis=1, keepdims=True) * inv_cnt          # (3,1)
    diff = u - mean
    var = jnp.sum(diff * diff, axis=1, keepdims=True) * inv_cnt  # (3,1)
    scale = lax.rsqrt(var + BN_EPS) * gamma_ref[...]             # (3,1)
    y = diff * scale + beta_ref[...]

    s_ref[...] = s
    u_ref[...] = u
    y_ref[...] = y
    # TODO(synk): BatchNorm running_mean/running_var state updates are not modeled.


def _im2col(x, k):
    """(N,C,H,W) -> (C*k*k, N*HO*WO) patch matrix. Pure layout plumbing, 0 FLOPs."""
    n, c, h, w = x.shape
    ho, wo = h - k + 1, w - k + 1
    wins = [x[:, :, i:i + ho, j:j + wo] for i in range(k) for j in range(k)]
    p = jnp.stack(wins, axis=2)                      # (n, c, k*k, ho, wo)
    p = p.reshape(n, c * k * k, ho * wo)             # row index = c*k*k + i*k + j
    return jnp.transpose(p, (1, 0, 2)).reshape(c * k * k, n * ho * wo)


def model_forward(x2, x3, params):
    w1, b1, w2, b2, w3, b3, gamma, beta = params

    # Lane-dense operands (layout plumbing only).
    p1 = _im2col(x2, K1)                        # (27, 256)
    p2 = jnp.tile(_im2col(x3, K2), (1, N2))     # (12, 256): t broadcasts over batch
    w1m = w1.reshape(COUT, CIN * K1 * K1)       # (3, 27)
    w2m = w2.reshape(COUT, CIN * K2 * K2)       # (3, 12)
    w3m = w3.reshape(COUT, CIN)                 # (3, 3)
    col = lambda v: v.reshape(COUT, 1)

    vmem = pl.BlockSpec(memory_space=pltpu.MemorySpace.VMEM)
    out2d = jax.ShapeDtypeStruct((COUT, NPIX), jnp.float32)
    s2, u2, y2 = pl.pallas_call(
        model_kernel,
        out_shape=(out2d, out2d, out2d),
        in_specs=[vmem] * 10,
        out_specs=(vmem, vmem, vmem),
    )(w1m, col(b1), w2m, col(b2), w3m, col(b3), col(gamma), col(beta), p1, p2)

    def to_nchw(a):
        return jnp.transpose(a.reshape(COUT, N2, HO, WO), (1, 0, 2, 3))

    return to_nchw(s2), to_nchw(u2), to_nchw(y2)


def init_params(key):
    ks = jax.random.split(key, 6)

    def conv_init(kw_key, kb_key, cout, cin, k):
        fan_in = cin * k * k
        bound = 1.0 / math.sqrt(fan_in)      # PyTorch default Conv2d init range
        w = jax.random.uniform(kw_key, (cout, cin, k, k), jnp.float32, -bound, bound)
        b = jax.random.uniform(kb_key, (cout,), jnp.float32, -bound, bound)
        return w, b

    w1, b1 = conv_init(ks[0], ks[1], COUT, CIN, K1)
    w2, b2 = conv_init(ks[2], ks[3], COUT, CIN, K2)
    w3, b3 = conv_init(ks[4], ks[5], COUT, CIN, K3)
    gamma = jnp.ones((COUT,), jnp.float32)
    beta = jnp.zeros((COUT,), jnp.float32)
    return (w1, b1, w2, b2, w3, b3, gamma, beta)


def reference(x2, x3, params):
    """Plain-JAX reference for correctness checking."""
    w1, b1, w2, b2, w3, b3, gamma, beta = params
    dn = ('NCHW', 'OIHW', 'NCHW')

    def conv(x, w, b):
        o = lax.conv_general_dilated(x, w, (1, 1), 'VALID',
                                     dimension_numbers=dn, precision=_PREC)
        return o + b[None, :, None, None]

    s = conv(x2, w1, b1)
    t = conv(x3, w2, b2)
    u = conv(s + t, w3, b3)
    mean = jnp.mean(u, axis=(0, 2, 3), keepdims=True)
    var = jnp.mean((u - mean) ** 2, axis=(0, 2, 3), keepdims=True)
    y = (u - mean) / jnp.sqrt(var + BN_EPS) * gamma[None, :, None, None] \
        + beta[None, :, None, None]
    return s, u, y


if __name__ == "__main__":
    key = jax.random.PRNGKey(0)
    kx2, kx3, kp = jax.random.split(key, 3)
    x2 = jax.random.normal(kx2, (N2, CIN, H2, W2), jnp.float32)
    x3 = jax.random.normal(kx3, (N3, CIN, H3, W3), jnp.float32)
    params = init_params(kp)

    s, u, y = model_forward(x2, x3, params)
    jax.block_until_ready((s, u, y))

    s_r, u_r, y_r = reference(x2, x3, params)
    np.testing.assert_allclose(np.asarray(s), np.asarray(s_r), rtol=1e-4, atol=1e-4)
    np.testing.assert_allclose(np.asarray(u), np.asarray(u_r), rtol=1e-4, atol=1e-4)
    np.testing.assert_allclose(np.asarray(y), np.asarray(y_r), rtol=1e-4, atol=1e-4)

    print("KERNEL_OK")
</pallas_src>

<mosaic_0001>
module attributes {stable_mosaic.version = 11 : i64} {
  func.func @model_kernel(%arg0: memref<3x27xf32, #tpu.memory_space<vmem>>, %arg1: memref<3x1xf32, #tpu.memory_space<vmem>>, %arg2: memref<3x12xf32, #tpu.memory_space<vmem>>, %arg3: memref<3x1xf32, #tpu.memory_space<vmem>>, %arg4: memref<3x3xf32, #tpu.memory_space<vmem>>, %arg5: memref<3x1xf32, #tpu.memory_space<vmem>>, %arg6: memref<3x1xf32, #tpu.memory_space<vmem>>, %arg7: memref<3x1xf32, #tpu.memory_space<vmem>>, %arg8: memref<27x256xf32, #tpu.memory_space<vmem>>, %arg9: memref<12x256xf32, #tpu.memory_space<vmem>>, %arg10: memref<3x256xf32, #tpu.memory_space<vmem>>, %arg11: memref<3x256xf32, #tpu.memory_space<vmem>>, %arg12: memref<3x256xf32, #tpu.memory_space<vmem>>) attributes {dimension_semantics = [], scalar_prefetch = 0 : i64, scratch_operands = 0 : i64, tpu.core_type = #tpu.core_type<tc>} {
    %c0 = arith.constant 0 : index
    %c0_0 = arith.constant 0 : index
    %0 = vector.load %arg0[%c0, %c0_0] : memref<3x27xf32, #tpu.memory_space<vmem>>, vector<3x27xf32>
    %c0_1 = arith.constant 0 : index
    %c0_2 = arith.constant 0 : index
    %1 = vector.load %arg8[%c0_1, %c0_2] : memref<27x256xf32, #tpu.memory_space<vmem>>, vector<27x256xf32>
    %cst = arith.constant dense<0.000000e+00> : vector<3x256xf32>
    %2 = tpu.matmul %0, %1, %cst {dimension_numbers = #tpu.dot_dimension_numbers<[1], [0], [0], [1], [0, 0, 1, 1], [], []>, precision = #tpu.contract_precision<fp32>} : vector<3x27xf32>, vector<27x256xf32>, vector<3x256xf32> -> vector<3x256xf32>
    %c0_3 = arith.constant 0 : index
    %c0_4 = arith.constant 0 : index
    %3 = vector.load %arg1[%c0_3, %c0_4] : memref<3x1xf32, #tpu.memory_space<vmem>>, vector<3x1xf32>
    %4 = vector.broadcast %3 : vector<3x1xf32> to vector<3x256xf32>
    %5 = arith.addf %2, %4 : vector<3x256xf32>
    %c0_5 = arith.constant 0 : index
    %c0_6 = arith.constant 0 : index
    %6 = vector.load %arg2[%c0_5, %c0_6] : memref<3x12xf32, #tpu.memory_space<vmem>>, vector<3x12xf32>
    %c0_7 = arith.constant 0 : index
    %c0_8 = arith.constant 0 : index
    %7 = vector.load %arg9[%c0_7, %c0_8] : memref<12x256xf32, #tpu.memory_space<vmem>>, vector<12x256xf32>
    %cst_9 = arith.constant dense<0.000000e+00> : vector<3x256xf32>
    %8 = tpu.matmul %6, %7, %cst_9 {dimension_numbers = #tpu.dot_dimension_numbers<[1], [0], [0], [1], [0, 0, 1, 1], [], []>, precision = #tpu.contract_precision<fp32>} : vector<3x12xf32>, vector<12x256xf32>, vector<3x256xf32> -> vector<3x256xf32>
    %c0_10 = arith.constant 0 : index
    %c0_11 = arith.constant 0 : index
    %9 = vector.load %arg3[%c0_10, %c0_11] : memref<3x1xf32, #tpu.memory_space<vmem>>, vector<3x1xf32>
    %10 = vector.broadcast %9 : vector<3x1xf32> to vector<3x256xf32>
    %11 = arith.addf %8, %10 : vector<3x256xf32>
    %c0_12 = arith.constant 0 : index
    %c0_13 = arith.constant 0 : index
    %12 = vector.load %arg4[%c0_12, %c0_13] : memref<3x3xf32, #tpu.memory_space<vmem>>, vector<3x3xf32>
    %13 = arith.addf %5, %11 : vector<3x256xf32>
    %cst_14 = arith.constant dense<0.000000e+00> : vector<3x256xf32>
    %14 = tpu.matmul %12, %13, %cst_14 {dimension_numbers = #tpu.dot_dimension_numbers<[1], [0], [0], [1], [0, 0, 1, 1], [], []>, precision = #tpu.contract_precision<fp32>} : vector<3x3xf32>, vector<3x256xf32>, vector<3x256xf32> -> vector<3x256xf32>
    %c0_15 = arith.constant 0 : index
    %c0_16 = arith.constant 0 : index
    %15 = vector.load %arg5[%c0_15, %c0_16] : memref<3x1xf32, #tpu.memory_space<vmem>>, vector<3x1xf32>
    %16 = vector.broadcast %15 : vector<3x1xf32> to vector<3x256xf32>
    %17 = arith.addf %14, %16 : vector<3x256xf32>
    %cst_17 = arith.constant dense<0.000000e+00> : vector<3xf32>
    %18 = vector.multi_reduction <add>, %17, %cst_17 [1] : vector<3x256xf32> to vector<3xf32>
    %19 = vector.shape_cast %18 : vector<3xf32> to vector<3x1xf32>
    %cst_18 = arith.constant 3.906250e-03 : f32
    %20 = vector.broadcast %cst_18 : f32 to vector<3x1xf32>
    %21 = arith.mulf %19, %20 : vector<3x1xf32>
    %22 = vector.broadcast %21 : vector<3x1xf32> to vector<3x256xf32>
    %23 = arith.subf %17, %22 : vector<3x256xf32>
    %24 = arith.mulf %23, %23 : vector<3x256xf32>
    %cst_19 = arith.constant dense<0.000000e+00> : vector<3xf32>
    %25 = vector.multi_reduction <add>, %24, %cst_19 [1] : vector<3x256xf32> to vector<3xf32>
    %26 = vector.shape_cast %25 : vector<3xf32> to vector<3x1xf32>
    %cst_20 = arith.constant 3.906250e-03 : f32
    %27 = vector.broadcast %cst_20 : f32 to vector<3x1xf32>
    %28 = arith.mulf %26, %27 : vector<3x1xf32>
    %cst_21 = arith.constant 9.99999974E-6 : f32
    %29 = vector.broadcast %cst_21 : f32 to vector<3x1xf32>
    %30 = arith.addf %28, %29 : vector<3x1xf32>
    %31 = math.rsqrt %30 : vector<3x1xf32>
    %c0_22 = arith.constant 0 : index
    %c0_23 = arith.constant 0 : index
    %32 = vector.load %arg6[%c0_22, %c0_23] : memref<3x1xf32, #tpu.memory_space<vmem>>, vector<3x1xf32>
    %33 = arith.mulf %31, %32 : vector<3x1xf32>
    %34 = vector.broadcast %33 : vector<3x1xf32> to vector<3x256xf32>
    %35 = arith.mulf %23, %34 : vector<3x256xf32>
    %c0_24 = arith.constant 0 : index
    %c0_25 = arith.constant 0 : index
    %36 = vector.load %arg7[%c0_24, %c0_25] : memref<3x1xf32, #tpu.memory_space<vmem>>, vector<3x1xf32>
    %37 = vector.broadcast %36 : vector<3x1xf32> to vector<3x256xf32>
    %38 = arith.addf %35, %37 : vector<3x256xf32>
    %c0_26 = arith.constant 0 : index
    %c0_27 = arith.constant 0 : index
    %39 = vector.load %arg10[%c0_26, %c0_27] : memref<3x256xf32, #tpu.memory_space<vmem>>, vector<3x256xf32>
    tpu.vector_store %arg10[%c0_26, %c0_27], %5 {strides = array<i32>} : memref<3x256xf32, #tpu.memory_space<vmem>>, vector<3x256xf32>,
    %c0_28 = arith.constant 0 : index
    %c0_29 = arith.constant 0 : index
    %40 = vector.load %arg11[%c0_28, %c0_29] : memref<3x256xf32, #tpu.memory_space<vmem>>, vector<3x256xf32>
    tpu.vector_store %arg11[%c0_28, %c0_29], %17 {strides = array<i32>} : memref<3x256xf32, #tpu.memory_space<vmem>>, vector<3x256xf32>,
    %c0_30 = arith.constant 0 : index
    %c0_31 = arith.constant 0 : index
    %41 = vector.load %arg12[%c0_30, %c0_31] : memref<3x256xf32, #tpu.memory_space<vmem>>, vector<3x256xf32>
    tpu.vector_store %arg12[%c0_30, %c0_31], %38 {strides = array<i32>} : memref<3x256xf32, #tpu.memory_space<vmem>>, vector<3x256xf32>,
    return
  }
}

</mosaic_0001>

<llo_original>
// kernel: tpu_custom_call.1
$region0: #{tpu_custom_call.1}
  #allocation0 [shape = 'u32[]', space=smem, size = 0x4, offset = 0x4, fixed_abs, tag = 'smem constant byte address 0x4 - core index']
  #allocation1 [shape = 'u32[144,128]{1,0:T(1,128)}', space=vmem, size = 0x12000, scoped, tag = 'internal scratch']
  %s0 = inlined_call_operand.vmem [shape: f32[3,27], index: 0, kind: input, shape index: {}]
  %s1 = inlined_call_operand.vmem [shape: f32[3,1], index: 1, kind: input, shape index: {}]
  %s2 = inlined_call_operand.vmem [shape: f32[3,12], index: 2, kind: input, shape index: {}]
  %s3 = inlined_call_operand.vmem [shape: f32[3,1], index: 3, kind: input, shape index: {}]
  %s4 = inlined_call_operand.vmem [shape: f32[3,3], index: 4, kind: input, shape index: {}]
  %s5 = inlined_call_operand.vmem [shape: f32[3,1], index: 5, kind: input, shape index: {}]
  %s6 = inlined_call_operand.vmem [shape: f32[3,1], index: 6, kind: input, shape index: {}]
  %s7 = inlined_call_operand.vmem [shape: f32[3,1], index: 7, kind: input, shape index: {}]
  %s8 = inlined_call_operand.hbm [shape: f32[27,256], index: 8, kind: input, shape index: {}]
  %s9 = inlined_call_operand.vmem [shape: f32[12,256], index: 9, kind: input, shape index: {}]
  %s10 = inlined_call_operand.hbm [shape: f32[3,256], index: 10, kind: output, shape index: {0}]
  %s11 = inlined_call_operand.hbm [shape: f32[3,256], index: 11, kind: output, shape index: {1}]
  %s12 = inlined_call_operand.hbm [shape: f32[3,256], index: 12, kind: output, shape index: {2}]
  %13 = xla_tuple %s10, %s11, %s12
  %s14 = sld [smem:[#allocation0]]
  $region70: #{tpu_custom_call.1} parent=0
    _
  %s16 = ssub.s32 1, %s14
  %s17 = scalar_select 0, %s16, %s14
  $region1: #{tpu_custom_call.1} parent=0
    #allocation2 [shape = 'u8[32768]{0}', space=vmem, size = 0x8000, scoped, tag = 'input window, operand 8, single buffered']
    #allocation3 [shape = 's32[1]{0}', space=sflag, size = 0x4, scoped, tag = 'scoped memory for tpu_custom_call.1']
    #allocation4 [shape = 's32[1]{0}', space=sflag, size = 0x4, scoped, tag = 'scoped memory for tpu_custom_call.1']
    #allocation5 [shape = 'u8[4096]{0}', space=vmem, size = 0x1000, scoped, tag = 'output window, operand 0, single buffered']
    #allocation6 [shape = 'u8[4096]{0}', space=vmem, size = 0x1000, scoped, tag = 'output window, operand 1, single buffered']
    #allocation7 [shape = 's32[1]{0}', space=sflag, size = 0x4, scoped, tag = 'scoped memory for tpu_custom_call.1']
    #allocation8 [shape = 'u8[4096]{0}', space=vmem, size = 0x1000, scoped, tag = 'output window, operand 2, single buffered']
    %18 = vsyncpa [#allocation3], 0
    %19 = vsyncpa [#allocation4], 0
    %20 = vsyncpa [#allocation7], 0
    // Predicated region
    $region2: #{tpu_custom_call.1} parent=1 // pred_check
      _
    $region3: #{tpu_custom_call.1} parent=1 // pred_check_branch
      %22 = sbr.rel (0) target = $region5
    $region4: #{tpu_custom_call.1} parent=1 // pred_region
      _
    $region5: #{tpu_custom_call.1} parent=1 // pred_fallthru
      _
    // Predicated region
    $region6: #{tpu_custom_call.1} parent=1 // pred_check
      _
    $region7: #{tpu_custom_call.1} parent=1 // pred_check_branch
      %24 = sbr.rel (0) target = $region9
    $region8: #{tpu_custom_call.1} parent=1 // pred_region
      _
    $region9: #{tpu_custom_call.1} parent=1 // pred_fallthru
      _
    // Predicated region
    $region10: #{tpu_custom_call.1} parent=1 // pred_check
      _
    $region11: #{tpu_custom_call.1} parent=1 // pred_check_branch
      %26 = sbr.rel (0) target = $region13
    $region12: #{tpu_custom_call.1} parent=1 // pred_region
      _
    $region13: #{tpu_custom_call.1} parent=1 // pred_fallthru
      _
    // Predicated region
    $region14: #{tpu_custom_call.1} parent=1 // pred_check
      _
    $region15: #{tpu_custom_call.1} parent=1 // pred_check_branch
      %28 = sbr.rel (0) target = $region17
    $region16: #{tpu_custom_call.1} parent=1 // pred_region
      _
    $region17: #{tpu_custom_call.1} parent=1 // pred_fallthru
      _
    // Predicated region
    $region18: #{tpu_custom_call.1} parent=1 // pred_check
      _
    $region19: #{tpu_custom_call.1} parent=1 // pred_check_branch
      %30 = sbr.rel (0) target = $region21
    $region20: #{tpu_custom_call.1} parent=1 // pred_region
      _
    $region21: #{tpu_custom_call.1} parent=1 // pred_fallthru
      _
    // Predicated region
    $region22: #{tpu_custom_call.1} parent=1 // pred_check
      _
    $region23: #{tpu_custom_call.1} parent=1 // pred_check_branch
      %32 = sbr.rel (0) target = $region25
    $region24: #{tpu_custom_call.1} parent=1 // pred_region
      _
    $region25: #{tpu_custom_call.1} parent=1 // pred_fallthru
      _
    // Predicated region
    $region26: #{tpu_custom_call.1} parent=1 // pred_check
      _
    $region27: #{tpu_custom_call.1} parent=1 // pred_check_branch
      %34 = sbr.rel (0) target = $region29
    $region28: #{tpu_custom_call.1} parent=1 // pred_region
      _
    $region29: #{tpu_custom_call.1} parent=1 // pred_fallthru
      _
    // Predicated region
    $region30: #{tpu_custom_call.1} parent=1 // pred_check
      _
    $region31: #{tpu_custom_call.1} parent=1 // pred_check_branch
      %36 = sbr.rel (0) target = $region33
    $region32: #{tpu_custom_call.1} parent=1 // pred_region
      _
    $region33: #{tpu_custom_call.1} parent=1 // pred_fallthru
      _
    // Predicated region
    $region34: #{tpu_custom_call.1} parent=1 // pred_check
      _
    $region35: #{tpu_custom_call.1} parent=1 // pred_check_branch
      %38 = sbr.rel (0) target = $region37
    $region36: #{tpu_custom_call.1} parent=1 // pred_region
      %s40 = ssub.s32 1024, 1024
      %41 = vsyncadd [#allocation3], %s40
      %s42 = sshll.u32 [#allocation2], 4
      %s43 = int_to_ptr.vmem [resolvable:$true] %s42
      %48 = dma.hbm_to_vmem [thread:$0]  %s8, 1024, %s43, [#allocation3], 256, 256, 16
    $region37: #{tpu_custom_call.1} parent=1 // pred_fallthru
      _
    // Predicated region
    $region38: #{tpu_custom_call.1} parent=1 // pred_check
      _
    $region39: #{tpu_custom_call.1} parent=1 // pred_check_branch
      %50 = sbr.rel (0) target = $region41
    $region40: #{tpu_custom_call.1} parent=1 // pred_region
      _
    $region41: #{tpu_custom_call.1} parent=1 // pred_fallthru
      _
    // Predicated region
    $region42: #{tpu_custom_call.1} parent=1 // pred_check
      _
    $region43: #{tpu_custom_call.1} parent=1 // pred_check_branch
      %52 = sbr.rel (0) target = $region45
    $region44: #{tpu_custom_call.1} parent=1 // pred_region
      %53 = dma.done [#allocation3], 1024
    $region45: #{tpu_custom_call.1} parent=1 // pred_fallthru
      _
    %v54 = vld [vmem:[%s0] sm:$0x7]
    %v55 = vld [vmem:[#allocation2] sm:$0xff]
    %v56 = vld [vmem:[#allocation2 + $0x8] sm:$0xff]
    %v57 = vld [vmem:[#allocation2 + $0x10] sm:$0xff]
    %v58 = vld [vmem:[#allocation2 + $0x18] sm:$0xff]
    %v59 = vld [vmem:[#allocation2 + $0x20] sm:$0xff]
    %v60 = vld [vmem:[#allocation2 + $0x28] sm:$0xff]
    %v61 = vld [vmem:[#allocation2 + $0x30] sm:$0x7]
    %v62 = vld [vmem:[#allocation2 + $0x38] sm:$0x7]
    %v63 = vld [vmem:[%s1] sm:$0x7]
    %65 = vset.pattern.permute.xlu0 0
    %66 = vperm.xlu0 %65, %v63
    %v67 = vpop.permute.xlu0 %66
    %vm69 = vcmask 220160
    %v71 = vsel %vm69, %v54, 0
    %vm73 = vcmask 1042432
    %v75 = vsel %vm73, %v61, 0
    %v78 = vsel %vm73, %v62, 0
    %v80 = vand.u32 %v56, 4294901760
    %81 = vmatprep.subr.mxu0 %v80
    %v82 = vand.u32 %v55, 4294901760
    %83 = vmatpush1.msra.mxu0 %v82
    %v84 = vand.u32 %v58, 4294901760
    %85 = vmatprep.subr.mxu0 %v84
    %v86 = vand.u32 %v57, 4294901760
    %87 = vmatpush1.msra.mxu0 %v86
    %v88 = vand.u32 %v60, 4294901760
    %89 = vmatprep.subr.mxu0 %v88
    %v90 = vand.u32 %v59, 4294901760
    %91 = vmatpush1.msra.mxu0 %v90
    %v92 = vand.u32 %v78, 4294901760
    %93 = vmatprep.subr.mxu0 %v92
    %v94 = vand.u32 %v75, 4294901760
    %95 = vmatpush1.msra.mxu0 %v94
    %96 = vmatprep.subr.mxu0 0.0
    %97 = vmatpush1.msra.mxu0 0.0
    %98 = vmatprep.subr.mxu0 0.0
    %99 = vmatpush1.msra.mxu0 0.0
    %100 = vmatprep.subr.mxu0 0.0
    %101 = vmatpush1.msra.mxu0 0.0
    %102 = vmatprep.subr.mxu0 0.0
    %103 = vmatpush1.msra.mxu0 0.0
    %104 = vmatprep.subr.mxu0 0.0
    %105 = vmatpush1.msra.mxu0 0.0
    %106 = vmatprep.subr.mxu0 0.0
    %107 = vmatpush1.msra.mxu0 0.0
    %108 = vmatprep.subr.mxu0 0.0
    %109 = vmatpush1.msra.mxu0 0.0
    %110 = vmatprep.subr.mxu0 0.0
    %111 = vmatpush1.msra.mxu0 0.0
    %112 = vmatprep.subr.mxu0 0.0
    %113 = vmatpush1.msra.mxu0 0.0
    %114 = vmatprep.subr.mxu0 0.0
    %115 = vmatpush1.msra.mxu0 0.0
    %116 = vmatprep.subr.mxu0 0.0
    %117 = vmatpush1.msra.mxu0 0.0
    %118 = vmatprep.subr.mxu0 0.0
    %119 = vmatpush1.msra.mxu0 0.0
    %120 = vmatprep.subr.mxu0 0.0
    %121 = vmatpush1.msra.mxu0 0.0
    %122 = vmatprep.subr.mxu0 0.0
    %123 = vmatpush1.msra.mxu0 0.0
    %124 = vmatprep.subr.mxu0 0.0
    %125 = vmatpush1.msra.mxu0 0.0
    %126 = vmatprep.subr.mxu0 0.0
    %127 = vmatpush1.msra.mxu0 0.0
    %128 = vmatprep.subr.mxu0 0.0
    %129 = vmatpush1.msra.mxu0 0.0
    %130 = vmatprep.subr.mxu0 0.0
    %131 = vmatpush1.msra.mxu0 0.0
    %132 = vmatprep.subr.mxu0 0.0
    %133 = vmatpush1.msra.mxu0 0.0
    %134 = vmatprep.subr.mxu0 0.0
    %135 = vmatpush1.msra.mxu0 0.0
    %136 = vmatprep.subr.mxu0 0.0
    %137 = vmatpush1.msra.mxu0 0.0
    %138 = vmatprep.subr.mxu0 0.0
    %139 = vmatpush1.msra.mxu0 0.0
    %140 = vmatprep.subr.mxu0 0.0
    %141 = vmatpush1.msra.mxu0 0.0
    %142 = vmatprep.subr.mxu0 0.0
    %143 = vmatpush1.msra.mxu0 0.0
    %144 = vmatprep.subr.mxu0 0.0
    %145 = vmatpush1.msra.mxu0 0.0
    %146 = vmatprep.subr.mxu0 0.0
    %147 = vmatpush1.msra.mxu0 0.0
    %148 = vmatprep.subr.mxu0 0.0
    %149 = vmatpush1.msra.mxu0 0.0
    %150 = vmatprep.subr.mxu0 0.0
    %151 = vmatpush1.msra.mxu0 0.0
    %152 = vmatprep.mubr.f32.mxu0 0.0
    %v153 = vand.u32 %v71, 4294901760
    %v154 = vsub.f32 %v71, %v153
    %v155 = vand.u32 %v154, 4294901760
    %v156 = vsub.f32 %v154, %v155
    %v157 = vand.u32 %v156, 4294901760
    %158 = vmatmul.mubr.f32.gmra.mrb[0].mxu0 %v157
    %v159 = vpop.f32.mrb[0].mxu0
    %v160 = vadd.f32 %v67, %v159
    %v161 = vpop.f32.mrb[0].mxu0
    %v162 = vadd.f32 %v67, %v161
    %163 = vdwg.mxu0
    %v164 = vand.u32 %v56, 4294901760
    %v165 = vsub.f32 %v56, %v164
    %v166 = vand.u32 %v165, 4294901760
    %v167 = vsub.f32 %v165, %v166
    %v168 = vand.u32 %v167, 4294901760
    %169 = vmatprep.subr.mxu0 %v168
    %v170 = vand.u32 %v55, 4294901760
    %v171 = vsub.f32 %v55, %v170
    %v172 = vand.u32 %v171, 4294901760
    %v173 = vsub.f32 %v171, %v172
    %v174 = vand.u32 %v173, 4294901760
    %175 = vmatpush1.msra.mxu0 %v174
    %v176 = vand.u32 %v58, 4294901760
    %v177 = vsub.f32 %v58, %v176
    %v178 = vand.u32 %v177, 4294901760
    %v179 = vsub.f32 %v177, %v178
    %v180 = vand.u32 %v179, 4294901760
    %181 = vmatprep.subr.mxu0 %v180
    %v182 = vand.u32 %v57, 4294901760
    %v183 = vsub.f32 %v57, %v182
    %v184 = vand.u32 %v183, 4294901760
    %v185 = vsub.f32 %v183, %v184
    %v186 = vand.u32 %v185, 4294901760
    %187 = vmatpush1.msra.mxu0 %v186
    %v188 = vand.u32 %v60, 4294901760
    %v189 = vsub.f32 %v60, %v188
    %v190 = vand.u32 %v189, 4294901760
    %v191 = vsub.f32 %v189, %v190
    %v192 = vand.u32 %v191, 4294901760
    %193 = vmatprep.subr.mxu0 %v192
    %v194 = vand.u32 %v59, 4294901760
    %v195 = vsub.f32 %v59, %v194
    %v196 = vand.u32 %v195, 4294901760
    %v197 = vsub.f32 %v195, %v196
    %v198 = vand.u32 %v197, 4294901760
    %199 = vmatpush1.msra.mxu0 %v198
    %v200 = vand.u32 %v78, 4294901760
    %v201 = vsub.f32 %v78, %v200
    %v202 = vand.u32 %v201, 4294901760
    %v203 = vsub.f32 %v201, %v202
    %v204 = vand.u32 %v203, 4294901760
    %205 = vmatprep.subr.mxu0 %v204
    %v206 = vand.u32 %v75, 4294901760
    %v207 = vsub.f32 %v75, %v206
    %v208 = vand.u32 %v207, 4294901760
    %v209 = vsub.f32 %v207, %v208
    %v210 = vand.u32 %v209, 4294901760
    %211 = vmatpush1.msra.mxu0 %v210
    %212 = vmatprep.subr.mxu0 0.0
    %213 = vmatpush1.msra.mxu0 0.0
    %214 = vmatprep.subr.mxu0 0.0
    %215 = vmatpush1.msra.mxu0 0.0
    %216 = vmatprep.subr.mxu0 0.0
    %217 = vmatpush1.msra.mxu0 0.0
    %218 = vmatprep.subr.mxu0 0.0
    %219 = vmatpush1.msra.mxu0 0.0
    %220 = vmatprep.subr.mxu0 0.0
    %221 = vmatpush1.msra.mxu0 0.0
    %222 = vmatprep.subr.mxu0 0.0
    %223 = vmatpush1.msra.mxu0 0.0
    %224 = vmatprep.subr.mxu0 0.0
    %225 = vmatpush1.msra.mxu0 0.0
    %226 = vmatprep.subr.mxu0 0.0
    %227 = vmatpush1.msra.mxu0 0.0
    %228 = vmatprep.subr.mxu0 0.0
    %229 = vmatpush1.msra.mxu0 0.0
    %230 = vmatprep.subr.mxu0 0.0
    %231 = vmatpush1.msra.mxu0 0.0
    %232 = vmatprep.subr.mxu0 0.0
    %233 = vmatpush1.msra.mxu0 0.0
    %234 = vmatprep.subr.mxu0 0.0
    %235 = vmatpush1.msra.mxu0 0.0
    %236 = vmatprep.subr.mxu0 0.0
    %237 = vmatpush1.msra.mxu0 0.0
    %238 = vmatprep.subr.mxu0 0.0
    %239 = vmatpush1.msra.mxu0 0.0
    %240 = vmatprep.subr.mxu0 0.0
    %241 = vmatpush1.msra.mxu0 0.0
    %242 = vmatprep.subr.mxu0 0.0
    %243 = vmatpush1.msra.mxu0 0.0
    %244 = vmatprep.subr.mxu0 0.0
    %245 = vmatpush1.msra.mxu0 0.0
    %246 = vmatprep.subr.mxu0 0.0
    %247 = vmatpush1.msra.mxu0 0.0
    %248 = vmatprep.subr.mxu0 0.0
    %249 = vmatpush1.msra.mxu0 0.0
    %250 = vmatprep.subr.mxu0 0.0
    %251 = vmatpush1.msra.mxu0 0.0
    %252 = vmatprep.subr.mxu0 0.0
    %253 = vmatpush1.msra.mxu0 0.0
    %254 = vmatprep.subr.mxu0 0.0
    %255 = vmatpush1.msra.mxu0 0.0
    %256 = vmatprep.subr.mxu0 0.0
    %257 = vmatpush1.msra.mxu0 0.0
    %258 = vmatprep.subr.mxu0 0.0
    %259 = vmatpush1.msra.mxu0 0.0
    %260 = vmatprep.subr.mxu0 0.0
    %261 = vmatpush1.msra.mxu0 0.0
    %262 = vmatprep.subr.mxu0 0.0
    %263 = vmatpush1.msra.mxu0 0.0
    %264 = vmatprep.subr.mxu0 0.0
    %265 = vmatpush1.msra.mxu0 0.0
    %266 = vmatprep.subr.mxu0 0.0
    %267 = vmatpush1.msra.mxu0 0.0
    %268 = vmatprep.mubr.f32.mxu0 0.0
    %v269 = vand.u32 %v71, 4294901760
    %270 = vmatmul.mubr.f32.gmra.mrb[0].mxu0 %v269
    %v271 = vpop.f32.mrb[0].mxu0
    %v272 = vadd.f32 %v160, %v271
    %v273 = vpop.f32.mrb[0].mxu0
    %v274 = vadd.f32 %v162, %v273
    %275 = vdwg.mxu0
    %v276 = vand.u32 %v56, 4294901760
    %v277 = vsub.f32 %v56, %v276
    %278 = vmatprep.subr.mxu0 %v277
    %v279 = vand.u32 %v55, 4294901760
    %v280 = vsub.f32 %v55, %v279
    %281 = vmatpush1.msra.mxu0 %v280
    %v282 = vand.u32 %v58, 4294901760
    %v283 = vsub.f32 %v58, %v282
    %284 = vmatprep.subr.mxu0 %v283
    %v285 = vand.u32 %v57, 4294901760
    %v286 = vsub.f32 %v57, %v285
    %287 = vmatpush1.msra.mxu0 %v286
    %v288 = vand.u32 %v60, 4294901760
    %v289 = vsub.f32 %v60, %v288
    %290 = vmatprep.subr.mxu0 %v289
    %v291 = vand.u32 %v59, 4294901760
    %v292 = vsub.f32 %v59, %v291
    %293 = vmatpush1.msra.mxu0 %v292
    %v294 = vand.u32 %v78, 4294901760
    %v295 = vsub.f32 %v78, %v294
    %296 = vmatprep.subr.mxu0 %v295
    %v297 = vand.u32 %v75, 4294901760
    %v298 = vsub.f32 %v75, %v297
    %299 = vmatpush1.msra.mxu0 %v298
    %300 = vmatprep.subr.mxu0 0.0
    %301 = vmatpush1.msra.mxu0 0.0
    %302 = vmatprep.subr.mxu0 0.0
    %303 = vmatpush1.msra.mxu0 0.0
    %304 = vmatprep.subr.mxu0 0.0
    %305 = vmatpush1.msra.mxu0 0.0
    %306 = vmatprep.subr.mxu0 0.0
    %307 = vmatpush1.msra.mxu0 0.0
    %308 = vmatprep.subr.mxu0 0.0
    %309 = vmatpush1.msra.mxu0 0.0
    %310 = vmatprep.subr.mxu0 0.0
    %311 = vmatpush1.msra.mxu0 0.0
    %312 = vmatprep.subr.mxu0 0.0
    %313 = vmatpush1.msra.mxu0 0.0
    %314 = vmatprep.subr.mxu0 0.0
    %315 = vmatpush1.msra.mxu0 0.0
    %316 = vmatprep.subr.mxu0 0.0
    %317 = vmatpush1.msra.mxu0 0.0
    %318 = vmatprep.subr.mxu0 0.0
    %319 = vmatpush1.msra.mxu0 0.0
    %320 = vmatprep.subr.mxu0 0.0
    %321 = vmatpush1.msra.mxu0 0.0
    %322 = vmatprep.subr.mxu0 0.0
    %323 = vmatpush1.msra.mxu0 0.0
    %324 = vmatprep.subr.mxu0 0.0
    %325 = vmatpush1.msra.mxu0 0.0
    %326 = vmatprep.subr.mxu0 0.0
    %327 = vmatpush1.msra.mxu0 0.0
    %328 = vmatprep.subr.mxu0 0.0
    %329 = vmatpush1.msra.mxu0 0.0
    %330 = vmatprep.subr.mxu0 0.0
    %331 = vmatpush1.msra.mxu0 0.0
    %332 = vmatprep.subr.mxu0 0.0
    %333 = vmatpush1.msra.mxu0 0.0
    %334 = vmatprep.subr.mxu0 0.0
    %335 = vmatpush1.msra.mxu0 0.0
    %336 = vmatprep.subr.mxu0 0.0
    %337 = vmatpush1.msra.mxu0 0.0
    %338 = vmatprep.subr.mxu0 0.0
    %339 = vmatpush1.msra.mxu0 0.0
    %340 = vmatprep.subr.mxu0 0.0
    %341 = vmatpush1.msra.mxu0 0.0
    %342 = vmatprep.subr.mxu0 0.0
    %343 = vmatpush1.msra.mxu0 0.0
    %344 = vmatprep.subr.mxu0 0.0
    %345 = vmatpush1.msra.mxu0 0.0
    %346 = vmatprep.subr.mxu0 0.0
    %347 = vmatpush1.msra.mxu0 0.0
    %348 = vmatprep.subr.mxu0 0.0
    %349 = vmatpush1.msra.mxu0 0.0
    %350 = vmatprep.subr.mxu0 0.0
    %351 = vmatpush1.msra.mxu0 0.0
    %352 = vmatprep.subr.mxu0 0.0
    %353 = vmatpush1.msra.mxu0 0.0
    %354 = vmatprep.subr.mxu0 0.0
    %355 = vmatpush1.msra.mxu0 0.0
    %356 = vmatprep.mubr.f32.mxu0 0.0
    %v357 = vand.u32 %v71, 4294901760
    %v358 = vsub.f32 %v71, %v357
    %359 = vmatmul.mubr.f32.gmra.mrb[0].mxu0 %v358
    %v360 = vpop.f32.mrb[0].mxu0
    %v361 = vadd.f32 %v272, %v360
    %v362 = vpop.f32.mrb[0].mxu0
    %v363 = vadd.f32 %v274, %v362
    %364 = vdwg.mxu0
    %v365 = vand.u32 %v56, 4294901760
    %366 = vmatprep.subr.mxu0 %v365
    %v367 = vand.u32 %v55, 4294901760
    %368 = vmatpush1.msra.mxu0 %v367
    %v369 = vand.u32 %v58, 4294901760
    %370 = vmatprep.subr.mxu0 %v369
    %v371 = vand.u32 %v57, 4294901760
    %372 = vmatpush1.msra.mxu0 %v371
    %v373 = vand.u32 %v60, 4294901760
    %374 = vmatprep.subr.mxu0 %v373
    %v375 = vand.u32 %v59, 4294901760
    %376 = vmatpush1.msra.mxu0 %v375
    %v377 = vand.u32 %v78, 4294901760
    %378 = vmatprep.subr.mxu0 %v377
    %v379 = vand.u32 %v75, 4294901760
    %380 = vmatpush1.msra.mxu0 %v379
    %381 = vmatprep.subr.mxu0 0.0
    %382 = vmatpush1.msra.mxu0 0.0
    %383 = vmatprep.subr.mxu0 0.0
    %384 = vmatpush1.msra.mxu0 0.0
    %385 = vmatprep.subr.mxu0 0.0
    %386 = vmatpush1.msra.mxu0 0.0
    %387 = vmatprep.subr.mxu0 0.0
    %388 = vmatpush1.msra.mxu0 0.0
    %389 = vmatprep.subr.mxu0 0.0
    %390 = vmatpush1.msra.mxu0 0.0
    %391 = vmatprep.subr.mxu0 0.0
    %392 = vmatpush1.msra.mxu0 0.0
    %393 = vmatprep.subr.mxu0 0.0
    %394 = vmatpush1.msra.mxu0 0.0
    %395 = vmatprep.subr.mxu0 0.0
    %396 = vmatpush1.msra.mxu0 0.0
    %397 = vmatprep.subr.mxu0 0.0
    %398 = vmatpush1.msra.mxu0 0.0
    %399 = vmatprep.subr.mxu0 0.0
    %400 = vmatpush1.msra.mxu0 0.0
    %401 = vmatprep.subr.mxu0 0.0
    %402 = vmatpush1.msra.mxu0 0.0
    %403 = vmatprep.subr.mxu0 0.0
    %404 = vmatpush1.msra.mxu0 0.0
    %405 = vmatprep.subr.mxu0 0.0
    %406 = vmatpush1.msra.mxu0 0.0
    %407 = vmatprep.subr.mxu0 0.0
    %408 = vmatpush1.msra.mxu0 0.0
    %409 = vmatprep.subr.mxu0 0.0
    %410 = vmatpush1.msra.mxu0 0.0
    %411 = vmatprep.subr.mxu0 0.0
    %412 = vmatpush1.msra.mxu0 0.0
    %413 = vmatprep.subr.mxu0 0.0
    %414 = vmatpush1.msra.mxu0 0.0
    %415 = vmatprep.subr.mxu0 0.0
    %416 = vmatpush1.msra.mxu0 0.0
    %417 = vmatprep.subr.mxu0 0.0
    %418 = vmatpush1.msra.mxu0 0.0
    %419 = vmatprep.subr.mxu0 0.0
    %420 = vmatpush1.msra.mxu0 0.0
    %421 = vmatprep.subr.mxu0 0.0
    %422 = vmatpush1.msra.mxu0 0.0
    %423 = vmatprep.subr.mxu0 0.0
    %424 = vmatpush1.msra.mxu0 0.0
    %425 = vmatprep.subr.mxu0 0.0
    %426 = vmatpush1.msra.mxu0 0.0
    %427 = vmatprep.subr.mxu0 0.0
    %428 = vmatpush1.msra.mxu0 0.0
    %429 = vmatprep.subr.mxu0 0.0
    %430 = vmatpush1.msra.mxu0 0.0
    %431 = vmatprep.subr.mxu0 0.0
    %432 = vmatpush1.msra.mxu0 0.0
    %433 = vmatprep.subr.mxu0 0.0
    %434 = vmatpush1.msra.mxu0 0.0
    %435 = vmatprep.subr.mxu0 0.0
    %436 = vmatpush1.msra.mxu0 0.0
    %437 = vmatprep.mubr.f32.mxu0 0.0
    %v438 = vand.u32 %v71, 4294901760
    %v439 = vsub.f32 %v71, %v438
    %v440 = vand.u32 %v439, 4294901760
    %441 = vmatmul.mubr.f32.gmra.mrb[0].mxu0 %v440
    %v442 = vpop.f32.mrb[0].mxu0
    %v443 = vadd.f32 %v361, %v442
    %v444 = vpop.f32.mrb[0].mxu0
    %v445 = vadd.f32 %v363, %v444
    %446 = vdwg.mxu0
    %v447 = vand.u32 %v56, 4294901760
    %v448 = vsub.f32 %v56, %v447
    %v449 = vand.u32 %v448, 4294901760
    %450 = vmatprep.subr.mxu0 %v449
    %v451 = vand.u32 %v55, 4294901760
    %v452 = vsub.f32 %v55, %v451
    %v453 = vand.u32 %v452, 4294901760
    %454 = vmatpush1.msra.mxu0 %v453
    %v455 = vand.u32 %v58, 4294901760
    %v456 = vsub.f32 %v58, %v455
    %v457 = vand.u32 %v456, 4294901760
    %458 = vmatprep.subr.mxu0 %v457
    %v459 = vand.u32 %v57, 4294901760
    %v460 = vsub.f32 %v57, %v459
    %v461 = vand.u32 %v460, 4294901760
    %462 = vmatpush1.msra.mxu0 %v461
    %v463 = vand.u32 %v60, 4294901760
    %v464 = vsub.f32 %v60, %v463
    %v465 = vand.u32 %v464, 4294901760
    %466 = vmatprep.subr.mxu0 %v465
    %v467 = vand.u32 %v59, 4294901760
    %v468 = vsub.f32 %v59, %v467
    %v469 = vand.u32 %v468, 4294901760
    %470 = vmatpush1.msra.mxu0 %v469
    %v471 = vand.u32 %v78, 4294901760
    %v472 = vsub.f32 %v78, %v471
    %v473 = vand.u32 %v472, 4294901760
    %474 = vmatprep.subr.mxu0 %v473
    %v475 = vand.u32 %v75, 4294901760
    %v476 = vsub.f32 %v75, %v475
    %v477 = vand.u32 %v476, 4294901760
    %478 = vmatpush1.msra.mxu0 %v477
    %479 = vmatprep.subr.mxu0 0.0
    %480 = vmatpush1.msra.mxu0 0.0
    %481 = vmatprep.subr.mxu0 0.0
    %482 = vmatpush1.msra.mxu0 0.0
    %483 = vmatprep.subr.mxu0 0.0
    %484 = vmatpush1.msra.mxu0 0.0
    %485 = vmatprep.subr.mxu0 0.0
    %486 = vmatpush1.msra.mxu0 0.0
    %487 = vmatprep.subr.mxu0 0.0
    %488 = vmatpush1.msra.mxu0 0.0
    %489 = vmatprep.subr.mxu0 0.0
    %490 = vmatpush1.msra.mxu0 0.0
    %491 = vmatprep.subr.mxu0 0.0
    %492 = vmatpush1.msra.mxu0 0.0
    %493 = vmatprep.subr.mxu0 0.0
    %494 = vmatpush1.msra.mxu0 0.0
    %495 = vmatprep.subr.mxu0 0.0
    %496 = vmatpush1.msra.mxu0 0.0
    %497 = vmatprep.subr.mxu0 0.0
    %498 = vmatpush1.msra.mxu0 0.0
    %499 = vmatprep.subr.mxu0 0.0
    %500 = vmatpush1.msra.mxu0 0.0
    %501 = vmatprep.subr.mxu0 0.0
    %502 = vmatpush1.msra.mxu0 0.0
    %503 = vmatprep.subr.mxu0 0.0
    %504 = vmatpush1.msra.mxu0 0.0
    %505 = vmatprep.subr.mxu0 0.0
    %506 = vmatpush1.msra.mxu0 0.0
    %507 = vmatprep.subr.mxu0 0.0
    %508 = vmatpush1.msra.mxu0 0.0
    %509 = vmatprep.subr.mxu0 0.0
    %510 = vmatpush1.msra.mxu0 0.0
    %511 = vmatprep.subr.mxu0 0.0
    %512 = vmatpush1.msra.mxu0 0.0
    %513 = vmatprep.subr.mxu0 0.0
    %514 = vmatpush1.msra.mxu0 0.0
    %515 = vmatprep.subr.mxu0 0.0
    %516 = vmatpush1.msra.mxu0 0.0
    %517 = vmatprep.subr.mxu0 0.0
    %518 = vmatpush1.msra.mxu0 0.0
    %519 = vmatprep.subr.mxu0 0.0
    %520 = vmatpush1.msra.mxu0 0.0
    %521 = vmatprep.subr.mxu0 0.0
    %522 = vmatpush1.msra.mxu0 0.0
    %523 = vmatprep.subr.mxu0 0.0
    %524 = vmatpush1.msra.mxu0 0.0
    %525 = vmatprep.subr.mxu0 0.0
    %526 = vmatpush1.msra.mxu0 0.0
    %527 = vmatprep.subr.mxu0 0.0
    %528 = vmatpush1.msra.mxu0 0.0
    %529 = vmatprep.subr.mxu0 0.0
    %530 = vmatpush1.msra.mxu0 0.0
    %531 = vmatprep.subr.mxu0 0.0
    %532 = vmatpush1.msra.mxu0 0.0
    %533 = vmatprep.subr.mxu0 0.0
    %534 = vmatpush1.msra.mxu0 0.0
    %535 = vmatprep.mubr.f32.mxu0 0.0
    %v536 = vand.u32 %v71, 4294901760
    %537 = vmatmul.mubr.f32.gmra.mrb[0].mxu0 %v536
    %v538 = vpop.f32.mrb[0].mxu0
    %v539 = vadd.f32 %v443, %v538
    %v540 = vpop.f32.mrb[0].mxu0
    %v541 = vadd.f32 %v445, %v540
    %542 = vdwg.mxu0
    %v543 = vand.u32 %v56, 4294901760
    %544 = vmatprep.subr.mxu0 %v543
    %v545 = vand.u32 %v55, 4294901760
    %546 = vmatpush1.msra.mxu0 %v545
    %v547 = vand.u32 %v58, 4294901760
    %548 = vmatprep.subr.mxu0 %v547
    %v549 = vand.u32 %v57, 4294901760
    %550 = vmatpush1.msra.mxu0 %v549
    %v551 = vand.u32 %v60, 4294901760
    %552 = vmatprep.subr.mxu0 %v551
    %v553 = vand.u32 %v59, 4294901760
    %554 = vmatpush1.msra.mxu0 %v553
    %v555 = vand.u32 %v78, 4294901760
    %556 = vmatprep.subr.mxu0 %v555
    %v557 = vand.u32 %v75, 4294901760
    %558 = vmatpush1.msra.mxu0 %v557
    %559 = vmatprep.subr.mxu0 0.0
    %560 = vmatpush1.msra.mxu0 0.0
    %561 = vmatprep.subr.mxu0 0.0
    %562 = vmatpush1.msra.mxu0 0.0
    %563 = vmatprep.subr.mxu0 0.0
    %564 = vmatpush1.msra.mxu0 0.0
    %565 = vmatprep.subr.mxu0 0.0
    %566 = vmatpush1.msra.mxu0 0.0
    %567 = vmatprep.subr.mxu0 0.0
    %568 = vmatpush1.msra.mxu0 0.0
    %569 = vmatprep.subr.mxu0 0.0
    %570 = vmatpush1.msra.mxu0 0.0
    %571 = vmatprep.subr.mxu0 0.0
    %572 = vmatpush1.msra.mxu0 0.0
    %573 = vmatprep.subr.mxu0 0.0
    %574 = vmatpush1.msra.mxu0 0.0
    %575 = vmatprep.subr.mxu0 0.0
    %576 = vmatpush1.msra.mxu0 0.0
    %577 = vmatprep.subr.mxu0 0.0
    %578 = vmatpush1.msra.mxu0 0.0
    %579 = vmatprep.subr.mxu0 0.0
    %580 = vmatpush1.msra.mxu0 0.0
    %581 = vmatprep.subr.mxu0 0.0
    %582 = vmatpush1.msra.mxu0 0.0
    %583 = vmatprep.subr.mxu0 0.0
    %584 = vmatpush1.msra.mxu0 0.0
    %585 = vmatprep.subr.mxu0 0.0
    %586 = vmatpush1.msra.mxu0 0.0
    %587 = vmatprep.subr.mxu0 0.0
    %588 = vmatpush1.msra.mxu0 0.0
    %589 = vmatprep.subr.mxu0 0.0
    %590 = vmatpush1.msra.mxu0 0.0
    %591 = vmatprep.subr.mxu0 0.0
    %592 = vmatpush1.msra.mxu0 0.0
    %593 = vmatprep.subr.mxu0 0.0
    %594 = vmatpush1.msra.mxu0 0.0
    %595 = vmatprep.subr.mxu0 0.0
    %596 = vmatpush1.msra.mxu0 0.0
    %597 = vmatprep.subr.mxu0 0.0
    %598 = vmatpush1.msra.mxu0 0.0
    %599 = vmatprep.subr.mxu0 0.0
    %600 = vmatpush1.msra.mxu0 0.0
    %601 = vmatprep.subr.mxu0 0.0
    %602 = vmatpush1.msra.mxu0 0.0
    %603 = vmatprep.subr.mxu0 0.0
    %604 = vmatpush1.msra.mxu0 0.0
    %605 = vmatprep.subr.mxu0 0.0
    %606 = vmatpush1.msra.mxu0 0.0
    %607 = vmatprep.subr.mxu0 0.0
    %608 = vmatpush1.msra.mxu0 0.0
    %609 = vmatprep.subr.mxu0 0.0
    %610 = vmatpush1.msra.mxu0 0.0
    %611 = vmatprep.subr.mxu0 0.0
    %612 = vmatpush1.msra.mxu0 0.0
    %613 = vmatprep.subr.mxu0 0.0
    %614 = vmatpush1.msra.mxu0 0.0
    %615 = vmatprep.mubr.f32.mxu0 0.0
    %v616 = vand.u32 %v71, 4294901760
    %617 = vmatmul.mubr.f32.gmra.mrb[0].mxu0 %v616
    %v618 = vpop.f32.mrb[0].mxu0
    %v619 = vadd.f32 %v539, %v618
    %v620 = vpop.f32.mrb[0].mxu0
    %v621 = vadd.f32 %v541, %v620
    %622 = vdwg.mxu0
    %v623 = vld [vmem:[%s2] sm:$0x7]
    %v624 = vld [vmem:[%s9] sm:$0xff]
    %v625 = vld [vmem:[%s9 + $0x8] sm:$0xff]
    %v626 = vld [vmem:[%s9 + $0x10] sm:$0xf]
    %v627 = vld [vmem:[%s9 + $0x18] sm:$0xf]
    %v628 = vld [vmem:[%s3] sm:$0x7]
    %630 = vset.pattern.permute.xlu0 0
    %631 = vperm.xlu0 %630, %v628
    %v632 = vpop.permute.xlu0 %631
    %vm634 = vcmask 97280
    %v636 = vsel %vm634, %v623, 0
    %vm638 = vcmask 1043456
    %v640 = vsel %vm638, %v626, 0
    %v643 = vsel %vm638, %v627, 0
    %v645 = vand.u32 %v625, 4294901760
    %646 = vmatprep.subr.mxu0 %v645
    %v647 = vand.u32 %v624, 4294901760
    %648 = vmatpush1.msra.mxu0 %v647
    %v649 = vand.u32 %v643, 4294901760
    %650 = vmatprep.subr.mxu0 %v649
    %v651 = vand.u32 %v640, 4294901760
    %652 = vmatpush1.msra.mxu0 %v651
    %653 = vmatprep.subr.mxu0 0.0
    %654 = vmatpush1.msra.mxu0 0.0
    %655 = vmatprep.subr.mxu0 0.0
    %656 = vmatpush1.msra.mxu0 0.0
    %657 = vmatprep.subr.mxu0 0.0
    %658 = vmatpush1.msra.mxu0 0.0
    %659 = vmatprep.subr.mxu0 0.0
    %660 = vmatpush1.msra.mxu0 0.0
    %661 = vmatprep.subr.mxu0 0.0
    %662 = vmatpush1.msra.mxu0 0.0
    %663 = vmatprep.subr.mxu0 0.0
    %664 = vmatpush1.msra.mxu0 0.0
    %665 = vmatprep.subr.mxu0 0.0
    %666 = vmatpush1.msra.mxu0 0.0
    %667 = vmatprep.subr.mxu0 0.0
    %668 = vmatpush1.msra.mxu0 0.0
    %669 = vmatprep.subr.mxu0 0.0
    %670 = vmatpush1.msra.mxu0 0.0
    %671 = vmatprep.subr.mxu0 0.0
    %672 = vmatpush1.msra.mxu0 0.0
    %673 = vmatprep.subr.mxu0 0.0
    %674 = vmatpush1.msra.mxu0 0.0
    %675 = vmatprep.subr.mxu0 0.0
    %676 = vmatpush1.msra.mxu0 0.0
    %677 = vmatprep.subr.mxu0 0.0
    %678 = vmatpush1.msra.mxu0 0.0
    %679 = vmatprep.subr.mxu0 0.0
    %680 = vmatpush1.msra.mxu0 0.0
    %681 = vmatprep.subr.mxu0 0.0
    %682 = vmatpush1.msra.mxu0 0.0
    %683 = vmatprep.subr.mxu0 0.0
    %684 = vmatpush1.msra.mxu0 0.0
    %685 = vmatprep.subr.mxu0 0.0
    %686 = vmatpush1.msra.mxu0 0.0
    %687 = vmatprep.subr.mxu0 0.0
    %688 = vmatpush1.msra.mxu0 0.0
    %689 = vmatprep.subr.mxu0 0.0
    %690 = vmatpush1.msra.mxu0 0.0
    %691 = vmatprep.subr.mxu0 0.0
    %692 = vmatpush1.msra.mxu0 0.0
    %693 = vmatprep.subr.mxu0 0.0
    %694 = vmatpush1.msra.mxu0 0.0
    %695 = vmatprep.subr.mxu0 0.0
    %696 = vmatpush1.msra.mxu0 0.0
    %697 = vmatprep.subr.mxu0 0.0
    %698 = vmatpush1.msra.mxu0 0.0
    %699 = vmatprep.subr.mxu0 0.0
    %700 = vmatpush1.msra.mxu0 0.0
    %701 = vmatprep.subr.mxu0 0.0
    %702 = vmatpush1.msra.mxu0 0.0
    %703 = vmatprep.subr.mxu0 0.0
    %704 = vmatpush1.msra.mxu0 0.0
    %705 = vmatprep.subr.mxu0 0.0
    %706 = vmatpush1.msra.mxu0 0.0
    %707 = vmatprep.subr.mxu0 0.0
    %708 = vmatpush1.msra.mxu0 0.0
    %709 = vmatprep.subr.mxu0 0.0
    %710 = vmatpush1.msra.mxu0 0.0
    %711 = vmatprep.subr.mxu0 0.0
    %712 = vmatpush1.msra.mxu0 0.0
    %713 = vmatprep.mubr.f32.mxu0 0.0
    %v714 = vand.u32 %v636, 4294901760
    %v715 = vsub.f32 %v636, %v714
    %v716 = vand.u32 %v715, 4294901760
    %v717 = vsub.f32 %v715, %v716
    %v718 = vand.u32 %v717, 4294901760
    %719 = vmatmul.mubr.f32.gmra.mrb[0].mxu0 %v718
    %v720 = vpop.f32.mrb[0].mxu0
    %v721 = vadd.f32 %v632, %v720
    %v722 = vpop.f32.mrb[0].mxu0
    %v723 = vadd.f32 %v632, %v722
    %724 = vdwg.mxu0
    %v725 = vand.u32 %v625, 4294901760
    %v726 = vsub.f32 %v625, %v725
    %v727 = vand.u32 %v726, 4294901760
    %v728 = vsub.f32 %v726, %v727
    %v729 = vand.u32 %v728, 4294901760
    %730 = vmatprep.subr.mxu0 %v729
    %v731 = vand.u32 %v624, 4294901760
    %v732 = vsub.f32 %v624, %v731
    %v733 = vand.u32 %v732, 4294901760
    %v734 = vsub.f32 %v732, %v733
    %v735 = vand.u32 %v734, 4294901760
    %736 = vmatpush1.msra.mxu0 %v735
    %v737 = vand.u32 %v643, 4294901760
    %v738 = vsub.f32 %v643, %v737
    %v739 = vand.u32 %v738, 4294901760
    %v740 = vsub.f32 %v738, %v739
    %v741 = vand.u32 %v740, 4294901760
    %742 = vmatprep.subr.mxu0 %v741
    %v743 = vand.u32 %v640, 4294901760
    %v744 = vsub.f32 %v640, %v743
    %v745 = vand.u32 %v744, 4294901760
    %v746 = vsub.f32 %v744, %v745
    %v747 = vand.u32 %v746, 4294901760
    %748 = vmatpush1.msra.mxu0 %v747
    %749 = vmatprep.subr.mxu0 0.0
    %750 = vmatpush1.msra.mxu0 0.0
    %751 = vmatprep.subr.mxu0 0.0
    %752 = vmatpush1.msra.mxu0 0.0
    %753 = vmatprep.subr.mxu0 0.0
    %754 = vmatpush1.msra.mxu0 0.0
    %755 = vmatprep.subr.mxu0 0.0
    %756 = vmatpush1.msra.mxu0 0.0
    %757 = vmatprep.subr.mxu0 0.0
    %758 = vmatpush1.msra.mxu0 0.0
    %759 = vmatprep.subr.mxu0 0.0
    %760 = vmatpush1.msra.mxu0 0.0
    %761 = vmatprep.subr.mxu0 0.0
    %762 = vmatpush1.msra.mxu0 0.0
    %763 = vmatprep.subr.mxu0 0.0
    %764 = vmatpush1.msra.mxu0 0.0
    %765 = vmatprep.subr.mxu0 0.0
    %766 = vmatpush1.msra.mxu0 0.0
    %767 = vmatprep.subr.mxu0 0.0
    %768 = vmatpush1.msra.mxu0 0.0
    %769 = vmatprep.subr.mxu0 0.0
    %770 = vmatpush1.msra.mxu0 0.0
    %771 = vmatprep.subr.mxu0 0.0
    %772 = vmatpush1.msra.mxu0 0.0
    %773 = vmatprep.subr.mxu0 0.0
    %774 = vmatpush1.msra.mxu0 0.0
    %775 = vmatprep.subr.mxu0 0.0
    %776 = vmatpush1.msra.mxu0 0.0
    %777 = vmatprep.subr.mxu0 0.0
    %778 = vmatpush1.msra.mxu0 0.0
    %779 = vmatprep.subr.mxu0 0.0
    %780 = vmatpush1.msra.mxu0 0.0
    %781 = vmatprep.subr.mxu0 0.0
    %782 = vmatpush1.msra.mxu0 0.0
    %783 = vmatprep.subr.mxu0 0.0
    %784 = vmatpush1.msra.mxu0 0.0
    %785 = vmatprep.subr.mxu0 0.0
    %786 = vmatpush1.msra.mxu0 0.0
    %787 = vmatprep.subr.mxu0 0.0
    %788 = vmatpush1.msra.mxu0 0.0
    %789 = vmatprep.subr.mxu0 0.0
    %790 = vmatpush1.msra.mxu0 0.0
    %791 = vmatprep.subr.mxu0 0.0
    %792 = vmatpush1.msra.mxu0 0.0
    %793 = vmatprep.subr.mxu0 0.0
    %794 = vmatpush1.msra.mxu0 0.0
    %795 = vmatprep.subr.mxu0 0.0
    %796 = vmatpush1.msra.mxu0 0.0
    %797 = vmatprep.subr.mxu0 0.0
    %798 = vmatpush1.msra.mxu0 0.0
    %799 = vmatprep.subr.mxu0 0.0
    %800 = vmatpush1.msra.mxu0 0.0
    %801 = vmatprep.subr.mxu0 0.0
    %802 = vmatpush1.msra.mxu0 0.0
    %803 = vmatprep.subr.mxu0 0.0
    %804 = vmatpush1.msra.mxu0 0.0
    %805 = vmatprep.subr.mxu0 0.0
    %806 = vmatpush1.msra.mxu0 0.0
    %807 = vmatprep.subr.mxu0 0.0
    %808 = vmatpush1.msra.mxu0 0.0
    %809 = vmatprep.mubr.f32.mxu0 0.0
    %v810 = vand.u32 %v636, 4294901760
    %811 = vmatmul.mubr.f32.gmra.mrb[0].mxu0 %v810
    %v812 = vpop.f32.mrb[0].mxu0
    %v813 = vadd.f32 %v721, %v812
    %v814 = vpop.f32.mrb[0].mxu0
    %v815 = vadd.f32 %v723, %v814
    %816 = vdwg.mxu0
    %v817 = vand.u32 %v625, 4294901760
    %v818 = vsub.f32 %v625, %v817
    %819 = vmatprep.subr.mxu0 %v818
    %v820 = vand.u32 %v624, 4294901760
    %v821 = vsub.f32 %v624, %v820
    %822 = vmatpush1.msra.mxu0 %v821
    %v823 = vand.u32 %v643, 4294901760
    %v824 = vsub.f32 %v643, %v823
    %825 = vmatprep.subr.mxu0 %v824
    %v826 = vand.u32 %v640, 4294901760
    %v827 = vsub.f32 %v640, %v826
    %828 = vmatpush1.msra.mxu0 %v827
    %829 = vmatprep.subr.mxu0 0.0
    %830 = vmatpush1.msra.mxu0 0.0
    %831 = vmatprep.subr.mxu0 0.0
    %832 = vmatpush1.msra.mxu0 0.0
    %833 = vmatprep.subr.mxu0 0.0
    %834 = vmatpush1.msra.mxu0 0.0
    %835 = vmatprep.subr.mxu0 0.0
    %836 = vmatpush1.msra.mxu0 0.0
    %837 = vmatprep.subr.mxu0 0.0
    %838 = vmatpush1.msra.mxu0 0.0
    %839 = vmatprep.subr.mxu0 0.0
    %840 = vmatpush1.msra.mxu0 0.0
    %841 = vmatprep.subr.mxu0 0.0
    %842 = vmatpush1.msra.mxu0 0.0
    %843 = vmatprep.subr.mxu0 0.0
    %844 = vmatpush1.msra.mxu0 0.0
    %845 = vmatprep.subr.mxu0 0.0
    %846 = vmatpush1.msra.mxu0 0.0
    %847 = vmatprep.subr.mxu0 0.0
    %848 = vmatpush1.msra.mxu0 0.0
    %849 = vmatprep.subr.mxu0 0.0
    %850 = vmatpush1.msra.mxu0 0.0
    %851 = vmatprep.subr.mxu0 0.0
    %852 = vmatpush1.msra.mxu0 0.0
    %853 = vmatprep.subr.mxu0 0.0
    %854 = vmatpush1.msra.mxu0 0.0
    %855 = vmatprep.subr.mxu0 0.0
    %856 = vmatpush1.msra.mxu0 0.0
    %857 = vmatprep.subr.mxu0 0.0
    %858 = vmatpush1.msra.mxu0 0.0
    %859 = vmatprep.subr.mxu0 0.0
    %860 = vmatpush1.msra.mxu0 0.0
    %861 = vmatprep.subr.mxu0 0.0
    %862 = vmatpush1.msra.mxu0 0.0
    %863 = vmatprep.subr.mxu0 0.0
    %864 = vmatpush1.msra.mxu0 0.0
    %865 = vmatprep.subr.mxu0 0.0
    %866 = vmatpush1.msra.mxu0 0.0
    %867 = vmatprep.subr.mxu0 0.0
    %868 = vmatpush1.msra.mxu0 0.0
    %869 = vmatprep.subr.mxu0 0.0
    %870 = vmatpush1.msra.mxu0 0.0
    %871 = vmatprep.subr.mxu0 0.0
    %872 = vmatpush1.msra.mxu0 0.0
    %873 = vmatprep.subr.mxu0 0.0
    %874 = vmatpush1.msra.mxu0 0.0
    %875 = vmatprep.subr.mxu0 0.0
    %876 = vmatpush1.msra.mxu0 0.0
    %877 = vmatprep.subr.mxu0 0.0
    %878 = vmatpush1.msra.mxu0 0.0
    %879 = vmatprep.subr.mxu0 0.0
    %880 = vmatpush1.msra.mxu0 0.0
    %881 = vmatprep.subr.mxu0 0.0
    %882 = vmatpush1.msra.mxu0 0.0
    %883 = vmatprep.subr.mxu0 0.0
    %884 = vmatpush1.msra.mxu0 0.0
    %885 = vmatprep.subr.mxu0 0.0
    %886 = vmatpush1.msra.mxu0 0.0
    %887 = vmatprep.subr.mxu0 0.0
    %888 = vmatpush1.msra.mxu0 0.0
    %889 = vmatprep.mubr.f32.mxu0 0.0
    %v890 = vand.u32 %v636, 4294901760
    %v891 = vsub.f32 %v636, %v890
    %892 = vmatmul.mubr.f32.gmra.mrb[0].mxu0 %v891
    %v893 = vpop.f32.mrb[0].mxu0
    %v894 = vadd.f32 %v813, %v893
    %v895 = vpop.f32.mrb[0].mxu0
    %v896 = vadd.f32 %v815, %v895
    %897 = vdwg.mxu0
    %v898 = vand.u32 %v625, 4294901760
    %899 = vmatprep.subr.mxu0 %v898
    %v900 = vand.u32 %v624, 4294901760
    %901 = vmatpush1.msra.mxu0 %v900
    %v902 = vand.u32 %v643, 4294901760
    %903 = vmatprep.subr.mxu0 %v902
    %v904 = vand.u32 %v640, 4294901760
    %905 = vmatpush1.msra.mxu0 %v904
    %906 = vmatprep.subr.mxu0 0.0
    %907 = vmatpush1.msra.mxu0 0.0
    %908 = vmatprep.subr.mxu0 0.0
    %909 = vmatpush1.msra.mxu0 0.0
    %910 = vmatprep.subr.mxu0 0.0
    %911 = vmatpush1.msra.mxu0 0.0
    %912 = vmatprep.subr.mxu0 0.0
    %913 = vmatpush1.msra.mxu0 0.0
    %914 = vmatprep.subr.mxu0 0.0
    %915 = vmatpush1.msra.mxu0 0.0
    %916 = vmatprep.subr.mxu0 0.0
    %917 = vmatpush1.msra.mxu0 0.0
    %918 = vmatprep.subr.mxu0 0.0
    %919 = vmatpush1.msra.mxu0 0.0
    %920 = vmatprep.subr.mxu0 0.0
    %921 = vmatpush1.msra.mxu0 0.0
    %922 = vmatprep.subr.mxu0 0.0
    %923 = vmatpush1.msra.mxu0 0.0
    %924 = vmatprep.subr.mxu0 0.0
    %925 = vmatpush1.msra.mxu0 0.0
    %926 = vmatprep.subr.mxu0 0.0
    %927 = vmatpush1.msra.mxu0 0.0
    %928 = vmatprep.subr.mxu0 0.0
    %929 = vmatpush1.msra.mxu0 0.0
    %930 = vmatprep.subr.mxu0 0.0
    %931 = vmatpush1.msra.mxu0 0.0
    %932 = vmatprep.subr.mxu0 0.0
    %933 = vmatpush1.msra.mxu0 0.0
    %934 = vmatprep.subr.mxu0 0.0
    %935 = vmatpush1.msra.mxu0 0.0
    %936 = vmatprep.subr.mxu0 0.0
    %937 = vmatpush1.msra.mxu0 0.0
    %938 = vmatprep.subr.mxu0 0.0
    %939 = vmatpush1.msra.mxu0 0.0
    %940 = vmatprep.subr.mxu0 0.0
    %941 = vmatpush1.msra.mxu0 0.0
    %942 = vmatprep.subr.mxu0 0.0
    %943 = vmatpush1.msra.mxu0 0.0
    %944 = vmatprep.subr.mxu0 0.0
    %945 = vmatpush1.msra.mxu0 0.0
    %946 = vmatprep.subr.mxu0 0.0
    %947 = vmatpush1.msra.mxu0 0.0
    %948 = vmatprep.subr.mxu0 0.0
    %949 = vmatpush1.msra.mxu0 0.0
    %950 = vmatprep.subr.mxu0 0.0
    %951 = vmatpush1.msra.mxu0 0.0
    %952 = vmatprep.subr.mxu0 0.0
    %953 = vmatpush1.msra.mxu0 0.0
    %954 = vmatprep.subr.mxu0 0.0
    %955 = vmatpush1.msra.mxu0 0.0
    %956 = vmatprep.subr.mxu0 0.0
    %957 = vmatpush1.msra.mxu0 0.0
    %958 = vmatprep.subr.mxu0 0.0
    %959 = vmatpush1.msra.mxu0 0.0
    %960 = vmatprep.subr.mxu0 0.0
    %961 = vmatpush1.msra.mxu0 0.0
    %962 = vmatprep.subr.mxu0 0.0
    %963 = vmatpush1.msra.mxu0 0.0
    %964 = vmatprep.subr.mxu0 0.0
    %965 = vmatpush1.msra.mxu0 0.0
    %966 = vmatprep.mubr.f32.mxu0 0.0
    %v967 = vand.u32 %v636, 4294901760
    %v968 = vsub.f32 %v636, %v967
    %v969 = vand.u32 %v968, 4294901760
    %970 = vmatmul.mubr.f32.gmra.mrb[0].mxu0 %v969
    %v971 = vpop.f32.mrb[0].mxu0
    %v972 = vadd.f32 %v894, %v971
    %v973 = vpop.f32.mrb[0].mxu0
    %v974 = vadd.f32 %v896, %v973
    %975 = vdwg.mxu0
    %v976 = vand.u32 %v625, 4294901760
    %v977 = vsub.f32 %v625, %v976
    %v978 = vand.u32 %v977, 4294901760
    %979 = vmatprep.subr.mxu0 %v978
    %v980 = vand.u32 %v624, 4294901760
    %v981 = vsub.f32 %v624, %v980
    %v982 = vand.u32 %v981, 4294901760
    %983 = vmatpush1.msra.mxu0 %v982
    %v984 = vand.u32 %v643, 4294901760
    %v985 = vsub.f32 %v643, %v984
    %v986 = vand.u32 %v985, 4294901760
    %987 = vmatprep.subr.mxu0 %v986
    %v988 = vand.u32 %v640, 4294901760
    %v989 = vsub.f32 %v640, %v988
    %v990 = vand.u32 %v989, 4294901760
    %991 = vmatpush1.msra.mxu0 %v990
    %992 = vmatprep.subr.mxu0 0.0
    %993 = vmatpush1.msra.mxu0 0.0
    %994 = vmatprep.subr.mxu0 0.0
    %995 = vmatpush1.msra.mxu0 0.0
    %996 = vmatprep.subr.mxu0 0.0
    %997 = vmatpush1.msra.mxu0 0.0
    %998 = vmatprep.subr.mxu0 0.0
    %999 = vmatpush1.msra.mxu0 0.0
    %1000 = vmatprep.subr.mxu0 0.0
    %1001 = vmatpush1.msra.mxu0 0.0
    %1002 = vmatprep.subr.mxu0 0.0
    %1003 = vmatpush1.msra.mxu0 0.0
    %1004 = vmatprep.subr.mxu0 0.0
    %1005 = vmatpush1.msra.mxu0 0.0
    %1006 = vmatprep.subr.mxu0 0.0
    %1007 = vmatpush1.msra.mxu0 0.0
    %1008 = vmatprep.subr.mxu0 0.0
    %1009 = vmatpush1.msra.mxu0 0.0
    %1010 = vmatprep.subr.mxu0 0.0
    %1011 = vmatpush1.msra.mxu0 0.0
    %1012 = vmatprep.subr.mxu0 0.0
    %1013 = vmatpush1.msra.mxu0 0.0
    %1014 = vmatprep.subr.mxu0 0.0
    %1015 = vmatpush1.msra.mxu0 0.0
    %1016 = vmatprep.subr.mxu0 0.0
    %1017 = vmatpush1.msra.mxu0 0.0
    %1018 = vmatprep.subr.mxu0 0.0
    %1019 = vmatpush1.msra.mxu0 0.0
    %1020 = vmatprep.subr.mxu0 0.0
    %1021 = vmatpush1.msra.mxu0 0.0
    %1022 = vmatprep.subr.mxu0 0.0
    %1023 = vmatpush1.msra.mxu0 0.0
    %1024 = vmatprep.subr.mxu0 0.0
    %1025 = vmatpush1.msra.mxu0 0.0
    %1026 = vmatprep.subr.mxu0 0.0
    %1027 = vmatpush1.msra.mxu0 0.0
    %1028 = vmatprep.subr.mxu0 0.0
    %1029 = vmatpush1.msra.mxu0 0.0
    %1030 = vmatprep.subr.mxu0 0.0
    %1031 = vmatpush1.msra.mxu0 0.0
    %1032 = vmatprep.subr.mxu0 0.0
    %1033 = vmatpush1.msra.mxu0 0.0
    %1034 = vmatprep.subr.mxu0 0.0
    %1035 = vmatpush1.msra.mxu0 0.0
    %1036 = vmatprep.subr.mxu0 0.0
    %1037 = vmatpush1.msra.mxu0 0.0
    %1038 = vmatprep.subr.mxu0 0.0
    %1039 = vmatpush1.msra.mxu0 0.0
    %1040 = vmatprep.subr.mxu0 0.0
    %1041 = vmatpush1.msra.mxu0 0.0
    %1042 = vmatprep.subr.mxu0 0.0
    %1043 = vmatpush1.msra.mxu0 0.0
    %1044 = vmatprep.subr.mxu0 0.0
    %1045 = vmatpush1.msra.mxu0 0.0
    %1046 = vmatprep.subr.mxu0 0.0
    %1047 = vmatpush1.msra.mxu0 0.0
    %1048 = vmatprep.subr.mxu0 0.0
    %1049 = vmatpush1.msra.mxu0 0.0
    %1050 = vmatprep.subr.mxu0 0.0
    %1051 = vmatpush1.msra.mxu0 0.0
    %1052 = vmatprep.mubr.f32.mxu0 0.0
    %v1053 = vand.u32 %v636, 4294901760
    %1054 = vmatmul.mubr.f32.gmra.mrb[0].mxu0 %v1053
    %v1055 = vpop.f32.mrb[0].mxu0
    %v1056 = vadd.f32 %v972, %v1055
    %v1057 = vpop.f32.mrb[0].mxu0
    %v1058 = vadd.f32 %v974, %v1057
    %1059 = vdwg.mxu0
    %v1060 = vand.u32 %v625, 4294901760
    %1061 = vmatprep.subr.mxu0 %v1060
    %v1062 = vand.u32 %v624, 4294901760
    %1063 = vmatpush1.msra.mxu0 %v1062
    %v1064 = vand.u32 %v643, 4294901760
    %1065 = vmatprep.subr.mxu0 %v1064
    %v1066 = vand.u32 %v640, 4294901760
    %1067 = vmatpush1.msra.mxu0 %v1066
    %1068 = vmatprep.subr.mxu0 0.0
    %1069 = vmatpush1.msra.mxu0 0.0
    %1070 = vmatprep.subr.mxu0 0.0
    %1071 = vmatpush1.msra.mxu0 0.0
    %1072 = vmatprep.subr.mxu0 0.0
    %1073 = vmatpush1.msra.mxu0 0.0
    %1074 = vmatprep.subr.mxu0 0.0
    %1075 = vmatpush1.msra.mxu0 0.0
    %1076 = vmatprep.subr.mxu0 0.0
    %1077 = vmatpush1.msra.mxu0 0.0
    %1078 = vmatprep.subr.mxu0 0.0
    %1079 = vmatpush1.msra.mxu0 0.0
    %1080 = vmatprep.subr.mxu0 0.0
    %1081 = vmatpush1.msra.mxu0 0.0
    %1082 = vmatprep.subr.mxu0 0.0
    %1083 = vmatpush1.msra.mxu0 0.0
    %1084 = vmatprep.subr.mxu0 0.0
    %1085 = vmatpush1.msra.mxu0 0.0
    %1086 = vmatprep.subr.mxu0 0.0
    %1087 = vmatpush1.msra.mxu0 0.0
    %1088 = vmatprep.subr.mxu0 0.0
    %1089 = vmatpush1.msra.mxu0 0.0
    %1090 = vmatprep.subr.mxu0 0.0
    %1091 = vmatpush1.msra.mxu0 0.0
    %1092 = vmatprep.subr.mxu0 0.0
    %1093 = vmatpush1.msra.mxu0 0.0
    %1094 = vmatprep.subr.mxu0 0.0
    %1095 = vmatpush1.msra.mxu0 0.0
    %1096 = vmatprep.subr.mxu0 0.0
    %1097 = vmatpush1.msra.mxu0 0.0
    %1098 = vmatprep.subr.mxu0 0.0
    %1099 = vmatpush1.msra.mxu0 0.0
    %1100 = vmatprep.subr.mxu0 0.0
    %1101 = vmatpush1.msra.mxu0 0.0
    %1102 = vmatprep.subr.mxu0 0.0
    %1103 = vmatpush1.msra.mxu0 0.0
    %1104 = vmatprep.subr.mxu0 0.0
    %1105 = vmatpush1.msra.mxu0 0.0
    %1106 = vmatprep.subr.mxu0 0.0
    %1107 = vmatpush1.msra.mxu0 0.0
    %1108 = vmatprep.subr.mxu0 0.0
    %1109 = vmatpush1.msra.mxu0 0.0
    %1110 = vmatprep.subr.mxu0 0.0
    %1111 = vmatpush1.msra.mxu0 0.0
    %1112 = vmatprep.subr.mxu0 0.0
    %1113 = vmatpush1.msra.mxu0 0.0
    %1114 = vmatprep.subr.mxu0 0.0
    %1115 = vmatpush1.msra.mxu0 0.0
    %1116 = vmatprep.subr.mxu0 0.0
    %1117 = vmatpush1.msra.mxu0 0.0
    %1118 = vmatprep.subr.mxu0 0.0
    %1119 = vmatpush1.msra.mxu0 0.0
    %1120 = vmatprep.subr.mxu0 0.0
    %1121 = vmatpush1.msra.mxu0 0.0
    %1122 = vmatprep.subr.mxu0 0.0
    %1123 = vmatpush1.msra.mxu0 0.0
    %1124 = vmatprep.subr.mxu0 0.0
    %1125 = vmatpush1.msra.mxu0 0.0
    %1126 = vmatprep.subr.mxu0 0.0
    %1127 = vmatpush1.msra.mxu0 0.0
    %1128 = vmatprep.mubr.f32.mxu0 0.0
    %v1129 = vand.u32 %v636, 4294901760
    %1130 = vmatmul.mubr.f32.gmra.mrb[0].mxu0 %v1129
    %v1131 = vpop.f32.mrb[0].mxu0
    %v1132 = vadd.f32 %v1056, %v1131
    %v1133 = vpop.f32.mrb[0].mxu0
    %v1134 = vadd.f32 %v1058, %v1133
    %1135 = vdwg.mxu0
    %v1136 = vld [vmem:[%s4] sm:$0x7]
    %v1137 = vadd.f32 %v619, %v1132
    %v1138 = vadd.f32 %v621, %v1134
    %v1139 = vld [vmem:[%s5] sm:$0x7]
    %1141 = vset.pattern.permute.xlu0 0
    %1142 = vperm.xlu0 %1141, %v1139
    %v1143 = vpop.permute.xlu0 %1142
    %vm1145 = vcmask 23552
    %v1147 = vsel %vm1145, %v1136, 0
    %v1150 = vsel %vm73, %v1137, 0
    %v1153 = vsel %vm73, %v1138, 0
    %v1155 = vand.u32 %v1153, 4294901760
    %1156 = vmatprep.subr.mxu0 %v1155
    %v1157 = vand.u32 %v1150, 4294901760
    %1158 = vmatpush1.msra.mxu0 %v1157
    %1159 = vmatprep.subr.mxu0 0.0
    %1160 = vmatpush1.msra.mxu0 0.0
    %1161 = vmatprep.subr.mxu0 0.0
    %1162 = vmatpush1.msra.mxu0 0.0
    %1163 = vmatprep.subr.mxu0 0.0
    %1164 = vmatpush1.msra.mxu0 0.0
    %1165 = vmatprep.subr.mxu0 0.0
    %1166 = vmatpush1.msra.mxu0 0.0
    %1167 = vmatprep.subr.mxu0 0.0
    %1168 = vmatpush1.msra.mxu0 0.0
    %1169 = vmatprep.subr.mxu0 0.0
    %1170 = vmatpush1.msra.mxu0 0.0
    %1171 = vmatprep.subr.mxu0 0.0
    %1172 = vmatpush1.msra.mxu0 0.0
    %1173 = vmatprep.subr.mxu0 0.0
    %1174 = vmatpush1.msra.mxu0 0.0
    %1175 = vmatprep.subr.mxu0 0.0
    %1176 = vmatpush1.msra.mxu0 0.0
    %1177 = vmatprep.subr.mxu0 0.0
    %1178 = vmatpush1.msra.mxu0 0.0
    %1179 = vmatprep.subr.mxu0 0.0
    %1180 = vmatpush1.msra.mxu0 0.0
    %1181 = vmatprep.subr.mxu0 0.0
    %1182 = vmatpush1.msra.mxu0 0.0
    %1183 = vmatprep.subr.mxu0 0.0
    %1184 = vmatpush1.msra.mxu0 0.0
    %1185 = vmatprep.subr.mxu0 0.0
    %1186 = vmatpush1.msra.mxu0 0.0
    %1187 = vmatprep.subr.mxu0 0.0
    %1188 = vmatpush1.msra.mxu0 0.0
    %1189 = vmatprep.subr.mxu0 0.0
    %1190 = vmatpush1.msra.mxu0 0.0
    %1191 = vmatprep.subr.mxu0 0.0
    %1192 = vmatpush1.msra.mxu0 0.0
    %1193 = vmatprep.subr.mxu0 0.0
    %1194 = vmatpush1.msra.mxu0 0.0
    %1195 = vmatprep.subr.mxu0 0.0
    %1196 = vmatpush1.msra.mxu0 0.0
    %1197 = vmatprep.subr.mxu0 0.0
    %1198 = vmatpush1.msra.mxu0 0.0
    %1199 = vmatprep.subr.mxu0 0.0
    %1200 = vmatpush1.msra.mxu0 0.0
    %1201 = vmatprep.subr.mxu0 0.0
    %1202 = vmatpush1.msra.mxu0 0.0
    %1203 = vmatprep.subr.mxu0 0.0
    %1204 = vmatpush1.msra.mxu0 0.0
    %1205 = vmatprep.subr.mxu0 0.0
    %1206 = vmatpush1.msra.mxu0 0.0
    %1207 = vmatprep.subr.mxu0 0.0
    %1208 = vmatpush1.msra.mxu0 0.0
    %1209 = vmatprep.subr.mxu0 0.0
    %1210 = vmatpush1.msra.mxu0 0.0
    %1211 = vmatprep.subr.mxu0 0.0
    %1212 = vmatpush1.msra.mxu0 0.0
    %1213 = vmatprep.subr.mxu0 0.0
    %1214 = vmatpush1.msra.mxu0 0.0
    %1215 = vmatprep.subr.mxu0 0.0
    %1216 = vmatpush1.msra.mxu0 0.0
    %1217 = vmatprep.subr.mxu0 0.0
    %1218 = vmatpush1.msra.mxu0 0.0
    %1219 = vmatprep.subr.mxu0 0.0
    %1220 = vmatpush1.msra.mxu0 0.0
    %1221 = vmatprep.mubr.f32.mxu0 0.0
    %v1222 = vand.u32 %v1147, 4294901760
    %v1223 = vsub.f32 %v1147, %v1222
    %v1224 = vand.u32 %v1223, 4294901760
    %v1225 = vsub.f32 %v1223, %v1224
    %v1226 = vand.u32 %v1225, 4294901760
    %1227 = vmatmul.mubr.f32.gmra.mrb[0].mxu0 %v1226
    %v1228 = vpop.f32.mrb[0].mxu0
    %v1229 = vadd.f32 %v1143, %v1228
    %v1230 = vpop.f32.mrb[0].mxu0
    %v1231 = vadd.f32 %v1143, %v1230
    %1232 = vdwg.mxu0
    %v1233 = vand.u32 %v1153, 4294901760
    %v1234 = vsub.f32 %v1153, %v1233
    %v1235 = vand.u32 %v1234, 4294901760
    %v1236 = vsub.f32 %v1234, %v1235
    %v1237 = vand.u32 %v1236, 4294901760
    %1238 = vmatprep.subr.mxu0 %v1237
    %v1239 = vand.u32 %v1150, 4294901760
    %v1240 = vsub.f32 %v1150, %v1239
    %v1241 = vand.u32 %v1240, 4294901760
    %v1242 = vsub.f32 %v1240, %v1241
    %v1243 = vand.u32 %v1242, 4294901760
    %1244 = vmatpush1.msra.mxu0 %v1243
    %1245 = vmatprep.subr.mxu0 0.0
    %1246 = vmatpush1.msra.mxu0 0.0
    %1247 = vmatprep.subr.mxu0 0.0
    %1248 = vmatpush1.msra.mxu0 0.0
    %1249 = vmatprep.subr.mxu0 0.0
    %1250 = vmatpush1.msra.mxu0 0.0
    %1251 = vmatprep.subr.mxu0 0.0
    %1252 = vmatpush1.msra.mxu0 0.0
    %1253 = vmatprep.subr.mxu0 0.0
    %1254 = vmatpush1.msra.mxu0 0.0
    %1255 = vmatprep.subr.mxu0 0.0
    %1256 = vmatpush1.msra.mxu0 0.0
    %1257 = vmatprep.subr.mxu0 0.0
    %1258 = vmatpush1.msra.mxu0 0.0
    %1259 = vmatprep.subr.mxu0 0.0
    %1260 = vmatpush1.msra.mxu0 0.0
    %1261 = vmatprep.subr.mxu0 0.0
    %1262 = vmatpush1.msra.mxu0 0.0
    %1263 = vmatprep.subr.mxu0 0.0
    %1264 = vmatpush1.msra.mxu0 0.0
    %1265 = vmatprep.subr.mxu0 0.0
    %1266 = vmatpush1.msra.mxu0 0.0
    %1267 = vmatprep.subr.mxu0 0.0
    %1268 = vmatpush1.msra.mxu0 0.0
    %1269 = vmatprep.subr.mxu0 0.0
    %1270 = vmatpush1.msra.mxu0 0.0
    %1271 = vmatprep.subr.mxu0 0.0
    %1272 = vmatpush1.msra.mxu0 0.0
    %1273 = vmatprep.subr.mxu0 0.0
    %1274 = vmatpush1.msra.mxu0 0.0
    %1275 = vmatprep.subr.mxu0 0.0
    %1276 = vmatpush1.msra.mxu0 0.0
    %1277 = vmatprep.subr.mxu0 0.0
    %1278 = vmatpush1.msra.mxu0 0.0
    %1279 = vmatprep.subr.mxu0 0.0
    %1280 = vmatpush1.msra.mxu0 0.0
    %1281 = vmatprep.subr.mxu0 0.0
    %1282 = vmatpush1.msra.mxu0 0.0
    %1283 = vmatprep.subr.mxu0 0.0
    %1284 = vmatpush1.msra.mxu0 0.0
    %1285 = vmatprep.subr.mxu0 0.0
    %1286 = vmatpush1.msra.mxu0 0.0
    %1287 = vmatprep.subr.mxu0 0.0
    %1288 = vmatpush1.msra.mxu0 0.0
    %1289 = vmatprep.subr.mxu0 0.0
    %1290 = vmatpush1.msra.mxu0 0.0
    %1291 = vmatprep.subr.mxu0 0.0
    %1292 = vmatpush1.msra.mxu0 0.0
    %1293 = vmatprep.subr.mxu0 0.0
    %1294 = vmatpush1.msra.mxu0 0.0
    %1295 = vmatprep.subr.mxu0 0.0
    %1296 = vmatpush1.msra.mxu0 0.0
    %1297 = vmatprep.subr.mxu0 0.0
    %1298 = vmatpush1.msra.mxu0 0.0
    %1299 = vmatprep.subr.mxu0 0.0
    %1300 = vmatpush1.msra.mxu0 0.0
    %1301 = vmatprep.subr.mxu0 0.0
    %1302 = vmatpush1.msra.mxu0 0.0
    %1303 = vmatprep.subr.mxu0 0.0
    %1304 = vmatpush1.msra.mxu0 0.0
    %1305 = vmatprep.subr.mxu0 0.0
    %1306 = vmatpush1.msra.mxu0 0.0
    %1307 = vmatprep.mubr.f32.mxu0 0.0
    %v1308 = vand.u32 %v1147, 4294901760
    %1309 = vmatmul.mubr.f32.gmra.mrb[0].mxu0 %v1308
    %v1310 = vpop.f32.mrb[0].mxu0
    %v1311 = vadd.f32 %v1229, %v1310
    %v1312 = vpop.f32.mrb[0].mxu0
    %v1313 = vadd.f32 %v1231, %v1312
    %1314 = vdwg.mxu0
    %v1315 = vand.u32 %v1153, 4294901760
    %v1316 = vsub.f32 %v1153, %v1315
    %1317 = vmatprep.subr.mxu0 %v1316
    %v1318 = vand.u32 %v1150, 4294901760
    %v1319 = vsub.f32 %v1150, %v1318
    %1320 = vmatpush1.msra.mxu0 %v1319
    %1321 = vmatprep.subr.mxu0 0.0
    %1322 = vmatpush1.msra.mxu0 0.0
    %1323 = vmatprep.subr.mxu0 0.0
    %1324 = vmatpush1.msra.mxu0 0.0
    %1325 = vmatprep.subr.mxu0 0.0
    %1326 = vmatpush1.msra.mxu0 0.0
    %1327 = vmatprep.subr.mxu0 0.0
    %1328 = vmatpush1.msra.mxu0 0.0
    %1329 = vmatprep.subr.mxu0 0.0
    %1330 = vmatpush1.msra.mxu0 0.0
    %1331 = vmatprep.subr.mxu0 0.0
    %1332 = vmatpush1.msra.mxu0 0.0
    %1333 = vmatprep.subr.mxu0 0.0
    %1334 = vmatpush1.msra.mxu0 0.0
    %1335 = vmatprep.subr.mxu0 0.0
    %1336 = vmatpush1.msra.mxu0 0.0
    %1337 = vmatprep.subr.mxu0 0.0
    %1338 = vmatpush1.msra.mxu0 0.0
    %1339 = vmatprep.subr.mxu0 0.0
    %1340 = vmatpush1.msra.mxu0 0.0
    %1341 = vmatprep.subr.mxu0 0.0
    %1342 = vmatpush1.msra.mxu0 0.0
    %1343 = vmatprep.subr.mxu0 0.0
    %1344 = vmatpush1.msra.mxu0 0.0
    %1345 = vmatprep.subr.mxu0 0.0
    %1346 = vmatpush1.msra.mxu0 0.0
    %1347 = vmatprep.subr.mxu0 0.0
    %1348 = vmatpush1.msra.mxu0 0.0
    %1349 = vmatprep.subr.mxu0 0.0
    %1350 = vmatpush1.msra.mxu0 0.0
    %1351 = vmatprep.subr.mxu0 0.0
    %1352 = vmatpush1.msra.mxu0 0.0
    %1353 = vmatprep.subr.mxu0 0.0
    %1354 = vmatpush1.msra.mxu0 0.0
    %1355 = vmatprep.subr.mxu0 0.0
    %1356 = vmatpush1.msra.mxu0 0.0
    %1357 = vmatprep.subr.mxu0 0.0
    %1358 = vmatpush1.msra.mxu0 0.0
    %1359 = vmatprep.subr.mxu0 0.0
    %1360 = vmatpush1.msra.mxu0 0.0
    %1361 = vmatprep.subr.mxu0 0.0
    %1362 = vmatpush1.msra.mxu0 0.0
    %1363 = vmatprep.subr.mxu0 0.0
    %1364 = vmatpush1.msra.mxu0 0.0
    %1365 = vmatprep.subr.mxu0 0.0
    %1366 = vmatpush1.msra.mxu0 0.0
    %1367 = vmatprep.subr.mxu0 0.0
    %1368 = vmatpush1.msra.mxu0 0.0
    %1369 = vmatprep.subr.mxu0 0.0
    %1370 = vmatpush1.msra.mxu0 0.0
    %1371 = vmatprep.subr.mxu0 0.0
    %1372 = vmatpush1.msra.mxu0 0.0
    %1373 = vmatprep.subr.mxu0 0.0
    %1374 = vmatpush1.msra.mxu0 0.0
    %1375 = vmatprep.subr.mxu0 0.0
    %1376 = vmatpush1.msra.mxu0 0.0
    %1377 = vmatprep.subr.mxu0 0.0
    %1378 = vmatpush1.msra.mxu0 0.0
    %1379 = vmatprep.subr.mxu0 0.0
    %1380 = vmatpush1.msra.mxu0 0.0
    %1381 = vmatprep.subr.mxu0 0.0
    %1382 = vmatpush1.msra.mxu0 0.0
    %1383 = vmatprep.mubr.f32.mxu0 0.0
    %v1384 = vand.u32 %v1147, 4294901760
    %v1385 = vsub.f32 %v1147, %v1384
    %1386 = vmatmul.mubr.f32.gmra.mrb[0].mxu0 %v1385
    %v1387 = vpop.f32.mrb[0].mxu0
    %v1388 = vadd.f32 %v1311, %v1387
    %v1389 = vpop.f32.mrb[0].mxu0
    %v1390 = vadd.f32 %v1313, %v1389
    %1391 = vdwg.mxu0
    %v1392 = vand.u32 %v1153, 4294901760
    %1393 = vmatprep.subr.mxu0 %v1392
    %v1394 = vand.u32 %v1150, 4294901760
    %1395 = vmatpush1.msra.mxu0 %v1394
    %1396 = vmatprep.subr.mxu0 0.0
    %1397 = vmatpush1.msra.mxu0 0.0
    %1398 = vmatprep.subr.mxu0 0.0
    %1399 = vmatpush1.msra.mxu0 0.0
    %1400 = vmatprep.subr.mxu0 0.0
    %1401 = vmatpush1.msra.mxu0 0.0
    %1402 = vmatprep.subr.mxu0 0.0
    %1403 = vmatpush1.msra.mxu0 0.0
    %1404 = vmatprep.subr.mxu0 0.0
    %1405 = vmatpush1.msra.mxu0 0.0
    %1406 = vmatprep.subr.mxu0 0.0
    %1407 = vmatpush1.msra.mxu0 0.0
    %1408 = vmatprep.subr.mxu0 0.0
    %1409 = vmatpush1.msra.mxu0 0.0
    %1410 = vmatprep.subr.mxu0 0.0
    %1411 = vmatpush1.msra.mxu0 0.0
    %1412 = vmatprep.subr.mxu0 0.0
    %1413 = vmatpush1.msra.mxu0 0.0
    %1414 = vmatprep.subr.mxu0 0.0
    %1415 = vmatpush1.msra.mxu0 0.0
    %1416 = vmatprep.subr.mxu0 0.0
    %1417 = vmatpush1.msra.mxu0 0.0
    %1418 = vmatprep.subr.mxu0 0.0
    %1419 = vmatpush1.msra.mxu0 0.0
    %1420 = vmatprep.subr.mxu0 0.0
    %1421 = vmatpush1.msra.mxu0 0.0
    %1422 = vmatprep.subr.mxu0 0.0
    %1423 = vmatpush1.msra.mxu0 0.0
    %1424 = vmatprep.subr.mxu0 0.0
    %1425 = vmatpush1.msra.mxu0 0.0
    %1426 = vmatprep.subr.mxu0 0.0
    %1427 = vmatpush1.msra.mxu0 0.0
    %1428 = vmatprep.subr.mxu0 0.0
    %1429 = vmatpush1.msra.mxu0 0.0
    %1430 = vmatprep.subr.mxu0 0.0
    %1431 = vmatpush1.msra.mxu0 0.0
    %1432 = vmatprep.subr.mxu0 0.0
    %1433 = vmatpush1.msra.mxu0 0.0
    %1434 = vmatprep.subr.mxu0 0.0
    %1435 = vmatpush1.msra.mxu0 0.0
    %1436 = vmatprep.subr.mxu0 0.0
    %1437 = vmatpush1.msra.mxu0 0.0
    %1438 = vmatprep.subr.mxu0 0.0
    %1439 = vmatpush1.msra.mxu0 0.0
    %1440 = vmatprep.subr.mxu0 0.0
    %1441 = vmatpush1.msra.mxu0 0.0
    %1442 = vmatprep.subr.mxu0 0.0
    %1443 = vmatpush1.msra.mxu0 0.0
    %1444 = vmatprep.subr.mxu0 0.0
    %1445 = vmatpush1.msra.mxu0 0.0
    %1446 = vmatprep.subr.mxu0 0.0
    %1447 = vmatpush1.msra.mxu0 0.0
    %1448 = vmatprep.subr.mxu0 0.0
    %1449 = vmatpush1.msra.mxu0 0.0
    %1450 = vmatprep.subr.mxu0 0.0
    %1451 = vmatpush1.msra.mxu0 0.0
    %1452 = vmatprep.subr.mxu0 0.0
    %1453 = vmatpush1.msra.mxu0 0.0
    %1454 = vmatprep.subr.mxu0 0.0
    %1455 = vmatpush1.msra.mxu0 0.0
    %1456 = vmatprep.subr.mxu0 0.0
    %1457 = vmatpush1.msra.mxu0 0.0
    %1458 = vmatprep.mubr.f32.mxu0 0.0
    %v1459 = vand.u32 %v1147, 4294901760
    %v1460 = vsub.f32 %v1147, %v1459
    %v1461 = vand.u32 %v1460, 4294901760
    %1462 = vmatmul.mubr.f32.gmra.mrb[0].mxu0 %v1461
    %v1463 = vpop.f32.mrb[0].mxu0
    %v1464 = vadd.f32 %v1388, %v1463
    %v1465 = vpop.f32.mrb[0].mxu0
    %v1466 = vadd.f32 %v1390, %v1465
    %1467 = vdwg.mxu0
    %v1468 = vand.u32 %v1153, 4294901760
    %v1469 = vsub.f32 %v1153, %v1468
    %v1470 = vand.u32 %v1469, 4294901760
    %1471 = vmatprep.subr.mxu0 %v1470
    %v1472 = vand.u32 %v1150, 4294901760
    %v1473 = vsub.f32 %v1150, %v1472
    %v1474 = vand.u32 %v1473, 4294901760
    %1475 = vmatpush1.msra.mxu0 %v1474
    %1476 = vmatprep.subr.mxu0 0.0
    %1477 = vmatpush1.msra.mxu0 0.0
    %1478 = vmatprep.subr.mxu0 0.0
    %1479 = vmatpush1.msra.mxu0 0.0
    %1480 = vmatprep.subr.mxu0 0.0
    %1481 = vmatpush1.msra.mxu0 0.0
    %1482 = vmatprep.subr.mxu0 0.0
    %1483 = vmatpush1.msra.mxu0 0.0
    %1484 = vmatprep.subr.mxu0 0.0
    %1485 = vmatpush1.msra.mxu0 0.0
    %1486 = vmatprep.subr.mxu0 0.0
    %1487 = vmatpush1.msra.mxu0 0.0
    %1488 = vmatprep.subr.mxu0 0.0
    %1489 = vmatpush1.msra.mxu0 0.0
    %1490 = vmatprep.subr.mxu0 0.0
    %1491 = vmatpush1.msra.mxu0 0.0
    %1492 = vmatprep.subr.mxu0 0.0
    %1493 = vmatpush1.msra.mxu0 0.0
    %1494 = vmatprep.subr.mxu0 0.0
    %1495 = vmatpush1.msra.mxu0 0.0
    %1496 = vmatprep.subr.mxu0 0.0
    %1497 = vmatpush1.msra.mxu0 0.0
    %1498 = vmatprep.subr.mxu0 0.0
    %1499 = vmatpush1.msra.mxu0 0.0
    %1500 = vmatprep.subr.mxu0 0.0
    %1501 = vmatpush1.msra.mxu0 0.0
    %1502 = vmatprep.subr.mxu0 0.0
    %1503 = vmatpush1.msra.mxu0 0.0
    %1504 = vmatprep.subr.mxu0 0.0
    %1505 = vmatpush1.msra.mxu0 0.0
    %1506 = vmatprep.subr.mxu0 0.0
    %1507 = vmatpush1.msra.mxu0 0.0
    %1508 = vmatprep.subr.mxu0 0.0
    %1509 = vmatpush1.msra.mxu0 0.0
    %1510 = vmatprep.subr.mxu0 0.0
    %1511 = vmatpush1.msra.mxu0 0.0
    %1512 = vmatprep.subr.mxu0 0.0
    %1513 = vmatpush1.msra.mxu0 0.0
    %1514 = vmatprep.subr.mxu0 0.0
    %1515 = vmatpush1.msra.mxu0 0.0
    %1516 = vmatprep.subr.mxu0 0.0
    %1517 = vmatpush1.msra.mxu0 0.0
    %1518 = vmatprep.subr.mxu0 0.0
    %1519 = vmatpush1.msra.mxu0 0.0
    %1520 = vmatprep.subr.mxu0 0.0
    %1521 = vmatpush1.msra.mxu0 0.0
    %1522 = vmatprep.subr.mxu0 0.0
    %1523 = vmatpush1.msra.mxu0 0.0
    %1524 = vmatprep.subr.mxu0 0.0
    %1525 = vmatpush1.msra.mxu0 0.0
    %1526 = vmatprep.subr.mxu0 0.0
    %1527 = vmatpush1.msra.mxu0 0.0
    %1528 = vmatprep.subr.mxu0 0.0
    %1529 = vmatpush1.msra.mxu0 0.0
    %1530 = vmatprep.subr.mxu0 0.0
    %1531 = vmatpush1.msra.mxu0 0.0
    %1532 = vmatprep.subr.mxu0 0.0
    %1533 = vmatpush1.msra.mxu0 0.0
    %1534 = vmatprep.subr.mxu0 0.0
    %1535 = vmatpush1.msra.mxu0 0.0
    %1536 = vmatprep.subr.mxu0 0.0
    %1537 = vmatpush1.msra.mxu0 0.0
    %1538 = vmatprep.mubr.f32.mxu0 0.0
    %v1539 = vand.u32 %v1147, 4294901760
    %1540 = vmatmul.mubr.f32.gmra.mrb[0].mxu0 %v1539
    %v1541 = vpop.f32.mrb[0].mxu0
    %v1542 = vadd.f32 %v1464, %v1541
    %v1543 = vpop.f32.mrb[0].mxu0
    %v1544 = vadd.f32 %v1466, %v1543
    %1545 = vdwg.mxu0
    %v1546 = vand.u32 %v1153, 4294901760
    %1547 = vmatprep.subr.mxu0 %v1546
    %v1548 = vand.u32 %v1150, 4294901760
    %1549 = vmatpush1.msra.mxu0 %v1548
    %1550 = vmatprep.subr.mxu0 0.0
    %1551 = vmatpush1.msra.mxu0 0.0
    %1552 = vmatprep.subr.mxu0 0.0
    %1553 = vmatpush1.msra.mxu0 0.0
    %1554 = vmatprep.subr.mxu0 0.0
    %1555 = vmatpush1.msra.mxu0 0.0
    %1556 = vmatprep.subr.mxu0 0.0
    %1557 = vmatpush1.msra.mxu0 0.0
    %1558 = vmatprep.subr.mxu0 0.0
    %1559 = vmatpush1.msra.mxu0 0.0
    %1560 = vmatprep.subr.mxu0 0.0
    %1561 = vmatpush1.msra.mxu0 0.0
    %1562 = vmatprep.subr.mxu0 0.0
    %1563 = vmatpush1.msra.mxu0 0.0
    %1564 = vmatprep.subr.mxu0 0.0
    %1565 = vmatpush1.msra.mxu0 0.0
    %1566 = vmatprep.subr.mxu0 0.0
    %1567 = vmatpush1.msra.mxu0 0.0
    %1568 = vmatprep.subr.mxu0 0.0
    %1569 = vmatpush1.msra.mxu0 0.0
    %1570 = vmatprep.subr.mxu0 0.0
    %1571 = vmatpush1.msra.mxu0 0.0
    %1572 = vmatprep.subr.mxu0 0.0
    %1573 = vmatpush1.msra.mxu0 0.0
    %1574 = vmatprep.subr.mxu0 0.0
    %1575 = vmatpush1.msra.mxu0 0.0
    %1576 = vmatprep.subr.mxu0 0.0
    %1577 = vmatpush1.msra.mxu0 0.0
    %1578 = vmatprep.subr.mxu0 0.0
    %1579 = vmatpush1.msra.mxu0 0.0
    %1580 = vmatprep.subr.mxu0 0.0
    %1581 = vmatpush1.msra.mxu0 0.0
    %1582 = vmatprep.subr.mxu0 0.0
    %1583 = vmatpush1.msra.mxu0 0.0
    %1584 = vmatprep.subr.mxu0 0.0
    %1585 = vmatpush1.msra.mxu0 0.0
    %1586 = vmatprep.subr.mxu0 0.0
    %1587 = vmatpush1.msra.mxu0 0.0
    %1588 = vmatprep.subr.mxu0 0.0
    %1589 = vmatpush1.msra.mxu0 0.0
    %1590 = vmatprep.subr.mxu0 0.0
    %1591 = vmatpush1.msra.mxu0 0.0
    %1592 = vmatprep.subr.mxu0 0.0
    %1593 = vmatpush1.msra.mxu0 0.0
    %1594 = vmatprep.subr.mxu0 0.0
    %1595 = vmatpush1.msra.mxu0 0.0
    %1596 = vmatprep.subr.mxu0 0.0
    %1597 = vmatpush1.msra.mxu0 0.0
    %1598 = vmatprep.subr.mxu0 0.0
    %1599 = vmatpush1.msra.mxu0 0.0
    %1600 = vmatprep.subr.mxu0 0.0
    %1601 = vmatpush1.msra.mxu0 0.0
    %1602 = vmatprep.subr.mxu0 0.0
    %1603 = vmatpush1.msra.mxu0 0.0
    %1604 = vmatprep.subr.mxu0 0.0
    %1605 = vmatpush1.msra.mxu0 0.0
    %1606 = vmatprep.subr.mxu0 0.0
    %1607 = vmatpush1.msra.mxu0 0.0
    %1608 = vmatprep.subr.mxu0 0.0
    %1609 = vmatpush1.msra.mxu0 0.0
    %1610 = vmatprep.subr.mxu0 0.0
    %1611 = vmatpush1.msra.mxu0 0.0
    %1612 = vmatprep.mubr.f32.mxu0 0.0
    %v1613 = vand.u32 %v1147, 4294901760
    %1614 = vmatmul.mubr.f32.gmra.mrb[0].mxu0 %v1613
    %v1615 = vpop.f32.mrb[0].mxu0
    %v1616 = vadd.f32 %v1542, %v1615
    %v1617 = vpop.f32.mrb[0].mxu0
    %v1618 = vadd.f32 %v1544, %v1617
    %1619 = vdwg.mxu0
    %v1620 = vsel %vm73, %v1616, 0.0
    %v1621 = vsel %vm73, %v1618, 0.0
    %v1622 = vadd.f32 %v1620, %v1621
    %1623 = vadd.xlane.f32.xlu0 %v1622
    %v1624 = vpop.xlane.xlu0 %1623
    %v1625 = vmul.f32 %v1624, 0.00390625
    %v1626 = vsub.f32 %v1616, %v1625
    %v1627 = vsub.f32 %v1618, %v1625
    %v1628 = vmul.f32 %v1626, %v1626
    %v1629 = vmul.f32 %v1627, %v1627
    %v1630 = vsel %vm73, %v1628, 0.0
    %v1631 = vsel %vm73, %v1629, 0.0
    %v1632 = vadd.f32 %v1630, %v1631
    %1633 = vadd.xlane.f32.xlu0 %v1632
    %v1634 = vpop.xlane.xlu0 %1633
    %v1635 = vmul.f32 %v1634, 0.00390625
    %v1636 = vadd.f32 %v1635, 1e-05
    %v1637 = vrsqrt.pop %v1636
    %v1638 = vld [vmem:[%s6] sm:$0x7]
    %v1639 = vmul.f32 %v1637, %v1638
    %1641 = vset.pattern.permute.xlu0 0
    %1642 = vperm.xlu0 %1641, %v1639
    %v1643 = vpop.permute.xlu0 %1642
    %v1645 = vmul.f32 %v1626, %v1643
    %v1646 = vmul.f32 %v1627, %v1643
    %v1647 = vld [vmem:[%s7] sm:$0x7]
    %1649 = vset.pattern.permute.xlu0 0
    %1650 = vperm.xlu0 %1649, %v1647
    %v1651 = vpop.permute.xlu0 %1650
    %v1653 = vadd.f32 %v1645, %v1651
    %v1654 = vadd.f32 %v1646, %v1651
    %v1657 = vcombine.low %v619, %v621
    %1659 = vst [vmem:[#allocation5] sm:$0x77] %v1657
    %v1662 = vcombine.low %v1616, %v1618
    %1664 = vst [vmem:[#allocation6] sm:$0x77] %v1662
    %v1667 = vcombine.low %v1653, %v1654
    %1669 = vst [vmem:[#allocation8] sm:$0x77] %v1667
    // Predicated region
    $region46: #{tpu_custom_call.1} parent=1 // pred_check
      _
    $region47: #{tpu_custom_call.1} parent=1 // pred_check_branch
      %1671 = sbr.rel (0) target = $region49
    $region48: #{tpu_custom_call.1} parent=1 // pred_region
      %s1673 = ssub.s32 128, 128
      %1674 = vsyncadd [#allocation4], %s1673
      %s1676 = sshll.u32 [#allocation5], 4
      %s1677 = int_to_ptr.vmem [resolvable:$true] %s1676
      %1679 = dma.vmem_to_hbm [thread:$0]  %s1677, 128, %s10, [#allocation4]
    $region49: #{tpu_custom_call.1} parent=1 // pred_fallthru
      _
    // Predicated region
    $region50: #{tpu_custom_call.1} parent=1 // pred_check
      _
    $region51: #{tpu_custom_call.1} parent=1 // pred_check_branch
      %1681 = sbr.rel (0) target = $region53
    $region52: #{tpu_custom_call.1} parent=1 // pred_region
      %s1683 = ssub.s32 128, 128
      %1684 = vsyncadd [#allocation7], %s1683
      %s1686 = sshll.u32 [#allocation6], 4
      %s1687 = int_to_ptr.vmem [resolvable:$true] %s1686
      %1689 = dma.vmem_to_hbm [thread:$0]  %s1687, 128, %s11, [#allocation7]
    $region53: #{tpu_custom_call.1} parent=1 // pred_fallthru
      _
    // Predicated region
    $region54: #{tpu_custom_call.1} parent=1 // pred_check
      _
    $region55: #{tpu_custom_call.1} parent=1 // pred_check_branch
      %1691 = sbr.rel (0) target = $region57
    $region56: #{tpu_custom_call.1} parent=1 // pred_region
      %s1693 = ssub.s32 128, 128
      %1694 = vsyncadd [#allocation7], %s1693
      %s1696 = sshll.u32 [#allocation8], 4
      %s1697 = int_to_ptr.vmem [resolvable:$true] %s1696
      %1699 = dma.vmem_to_hbm [thread:$0]  %s1697, 128, %s12, [#allocation7]
    $region57: #{tpu_custom_call.1} parent=1 // pred_fallthru
      _
    // Predicated region
    $region58: #{tpu_custom_call.1} parent=1 // pred_check
      _
    $region59: #{tpu_custom_call.1} parent=1 // pred_check_branch
      %1701 = sbr.rel (0) target = $region61
    $region60: #{tpu_custom_call.1} parent=1 // pred_region
      %1702 = dma.done [#allocation4], 128
    $region61: #{tpu_custom_call.1} parent=1 // pred_fallthru
      _
    // Predicated region
    $region62: #{tpu_custom_call.1} parent=1 // pred_check
      _
    $region63: #{tpu_custom_call.1} parent=1 // pred_check_branch
      %1704 = sbr.rel (0) target = $region65
    $region64: #{tpu_custom_call.1} parent=1 // pred_region
      %1705 = dma.done [#allocation7], 128
    $region65: #{tpu_custom_call.1} parent=1 // pred_fallthru
      _
    // Predicated region
    $region66: #{tpu_custom_call.1} parent=1 // pred_check
      _
    $region67: #{tpu_custom_call.1} parent=1 // pred_check_branch
      %1707 = sbr.rel (0) target = $region69
    $region68: #{tpu_custom_call.1} parent=1 // pred_region
      %1708 = dma.done [#allocation7], 128
    $region69: #{tpu_custom_call.1} parent=1 // pred_fallthru
      _
    %1709 = vsyncpa [#allocation3], 1
    %1710 = vsyncpa [#allocation4], 1
    %1711 = vsyncpa [#allocation7], 1

</llo_original>
